<compile_context>
chip_gen: v7x
topology: tpu7x:2x2x1
jax: 0.10.0
libtpu: 0.0.40
codegen_flags: <defaults>
</compile_context>

<pallas_src>
import functools

import jax
import jax.numpy as jnp
from jax.experimental import pallas as pl
from jax.experimental.pallas import tpu as pltpu


def _vmem():
    return pl.BlockSpec(memory_space=pltpu.MemorySpace.VMEM)


# ------------------------------ fused forward kernel ------------------------------
def _fused_kernel(emb_ref, wc_ref, bc_ref, *rest, B, S, D, nf, Ks, H, num_layers, out_pad):
    # emb_ref : (B*S, D) bf16      flat embeddings (row r = emb[r // S, r % S])
    # wc_ref  : (D, sum(kk)*nf) bf16   all conv branches/taps packed along columns
    # bc_ref  : (1, nK*nf) f32     conv biases packed per branch
    # rest    : per LSTM layer (W_in bf16 (Din,8H), W_hh f32 blockdiag (2H,8H), bias f32 (1,8H)),
    #           then the single combined output ref (B, out_pad) f32.
    f32 = jnp.float32
    bf16 = jnp.bfloat16
    n_lstm = 3 * num_layers
    lstm_refs = rest[:n_lstm]
    out_ref = rest[n_lstm]

    nK = len(Ks)
    H2 = 2 * H
    emb = emb_ref[...]                                           # (B*S, D) bf16

    # ------------------------------- CNN branches ---------------------------------
    # One wide matmul for every branch and tap; epilogue fully vectorized over batch.
    R = jnp.dot(emb, wc_ref[...], preferred_element_type=f32)    # (B*S, sum(kk)*nf) f32
    Rb = R.reshape(B, S, R.shape[1])                             # clean split (S % 8 == 0 typical)
    pooled_cols = []
    col = 0
    for br, kk in enumerate(Ks):
        L = S - kk + 1                                           # valid conv length
        acc = Rb[:, 0:L, col:col + nf]
        for j in range(1, kk):                                   # combine taps: shifted adds
            acc = acc + Rb[:, j:j + L, col + j * nf:col + (j + 1) * nf]
        act = jnp.maximum(acc + bc_ref[:, br * nf:(br + 1) * nf], 0.0)
        pooled_cols.append(jnp.max(act, axis=1))                 # global max-pool -> (B, nf)
        col += kk * nf

    # -------------------------------- BiLSTM --------------------------------------
    # Gate column layout: [i_f,i_b, f_f,f_b, o_f,o_b, g_f,g_b]; state columns [h_fwd | h_bwd].
    col2 = jax.lax.broadcasted_iota(jnp.int32, (B, H2), 1)
    fwd_half = col2 < H
    col8 = jax.lax.broadcasted_iota(jnp.int32, (B, 8 * H), 1)
    fwd_gate = (col8 % H2) < H                                   # fwd sub-block of every gate

    hs = None
    for layer in range(num_layers):
        w_in = lstm_refs[3 * layer][...]                         # (Din, 8H) bf16
        whh = lstm_refs[3 * layer + 1][...]                      # (2H, 8H) f32 block-diag
        bias = lstm_refs[3 * layer + 2][...]                     # (1, 8H) f32 (b_ih + b_hh folded)

        # Input projections for every (t, row) and both directions, hoisted out of the
        # recurrence as ONE matmul per layer (bias folded in once).
        if layer == 0:
            Z = jnp.dot(emb, w_in, preferred_element_type=f32) + bias          # (B*S, 8H)
        else:
            xin = jnp.concatenate(
                [jnp.where(fwd_half, hs[t], hs[S - 1 - t]) for t in range(S)], axis=0)
            Z = jnp.dot(xin.astype(bf16), w_in, preferred_element_type=f32) + bias
        z_list = [Z[t * B:(t + 1) * B, :] for t in range(S)]

        hcat = jnp.zeros((B, H2), f32)                           # [h_fwd | h_bwd]
        ccat = jnp.zeros((B, H2), f32)
        hs = []
        for i in range(S):                                       # fully unrolled recurrence
            zsel = jnp.where(fwd_gate, z_list[i], z_list[S - 1 - i])
            g = zsel + jnp.dot(hcat, whh, preferred_element_type=f32)          # (B, 8H)
            sg = jax.nn.sigmoid(g[:, 0:3 * H2])                  # i, f, o gates only
            gg = jnp.tanh(g[:, 3 * H2:4 * H2])                   # cell candidate
            ccat = sg[:, H2:2 * H2] * ccat + sg[:, 0:H2] * gg
            hcat = sg[:, 2 * H2:3 * H2] * jnp.tanh(ccat)
            hs.append(hcat)
        # TODO(synk): for large S switch the recurrence to lax.fori_loop + VMEM scratch for hs/Z
        # to bound live ranges; at these shapes the unrolled form keeps LLO scheduler visibility.

    # torch: relu(bilstm_out)[:, -1, :]  ==  [relu(h_fwd[S-1]) | relu(h_bwd after step at t=S-1)]
    last = jnp.where(fwd_half, hs[S - 1], hs[0])
    bi = jnp.maximum(last, 0.0)                                  # (B, 2H)

    # -------------------- single lane-dense store of all outputs ------------------
    pieces = pooled_cols + [bi]
    used = nK * nf + H2
    if out_pad > used:
        pieces.append(jnp.zeros((B, out_pad - used), f32))
    out_ref[...] = jnp.concatenate(pieces, axis=1)               # one full-ref store


# --------------------------------- wrapper ---------------------------------------
def sub_cnn_bilstm_forward(x_tokens, packed, *, Ks, n_filters, hidden, num_layers):
    B, S = x_tokens.shape
    D = packed["embedding"].shape[1]
    nK = len(Ks)
    H2 = 2 * hidden
    n_feat = nK * n_filters + H2
    out_pad = ((n_feat + 127) // 128) * 128                      # lane-dense combined output
    assert S >= max(Ks), "sequence shorter than the largest conv kernel"
    assert n_filters == 2 * hidden, "torch.cat requires n_filters == 2*lstm_hidden_dim"

    # Embedding lookup (gather) stays in XLA; the flat (B*S, D) rows double as the torch
    # `.view(S, B, D)` LSTM input (raw reshape, same memory order).  Table is stored bf16.
    emb_flat = jnp.take(packed["embedding"], x_tokens.reshape(-1), axis=0)     # (B*S, D) bf16

    lstm_flat = []
    for w_in, whh, bias in packed["lstm"]:
        lstm_flat += [w_in, whh, bias]

    kernel = functools.partial(
        _fused_kernel, B=B, S=S, D=D, nf=n_filters, Ks=tuple(Ks), H=hidden,
        num_layers=num_layers, out_pad=out_pad)

    out = pl.pallas_call(
        kernel,
        out_shape=jax.ShapeDtypeStruct((B, out_pad), jnp.float32),
        in_specs=[_vmem()] * (3 + 3 * num_layers),
        out_specs=_vmem(),
        compiler_params=pltpu.CompilerParams(vmem_limit_bytes=32 * 1024 * 1024),
    )(emb_flat, packed["w_cnn"], packed["b_cnn"], *lstm_flat)

    cnn_y = out[:, :nK * n_filters].reshape(B, n_filters, nK)    # torch .view(B, nf, -1)
    bi = out[:, nK * n_filters:n_feat]
    return jnp.concatenate([cnn_y, bi[..., None]], axis=2)       # (B, nf, nK + 1)


# ------------------------------ parameter handling --------------------------------
def init_params(key, W, D, nf, Ks, H, num_layers):
    """PyTorch-like parameters (per-direction LSTM weights, per-branch conv weights)."""
    keys = iter(jax.random.split(key, 2 + 2 * len(Ks) + 6 * num_layers))
    params = {"embedding": 0.1 * jax.random.normal(next(keys), (W, D), jnp.float32)}
    convs = []
    for kk in Ks:
        w = 0.1 * jax.random.normal(next(keys), (kk, D, nf), jnp.float32)   # taps x D x filters
        b = 0.1 * jax.random.normal(next(keys), (1, nf), jnp.float32)
        convs.append((w, b))
    params["convs"] = convs
    layers = []
    in_dim = D
    for _ in range(num_layers):
        wif = 0.1 * jax.random.normal(next(keys), (in_dim, 4 * H), jnp.float32)
        whf = 0.1 * jax.random.normal(next(keys), (H, 4 * H), jnp.float32)
        bf = 0.1 * jax.random.normal(next(keys), (1, 4 * H), jnp.float32)    # b_ih+b_hh folded
        wib = 0.1 * jax.random.normal(next(keys), (in_dim, 4 * H), jnp.float32)
        whb = 0.1 * jax.random.normal(next(keys), (H, 4 * H), jnp.float32)
        bb = 0.1 * jax.random.normal(next(keys), (1, 4 * H), jnp.float32)
        layers.append((wif, whf, bf, wib, whb, bb))
        in_dim = 2 * H
    params["lstm_layers"] = layers
    return params


_GATE_ORDER = (0, 1, 3, 2)   # torch (i,f,g,o) -> packed (i,f,o,g) so sigmoid cols are contiguous


def _interleave_gate_cols(wf, wb, H):
    # (X,4H) fwd + (X,4H) bwd -> (X,8H) columns [i_f,i_b, f_f,f_b, o_f,o_b, g_f,g_b]
    blocks = []
    for g in _GATE_ORDER:
        blocks.append(wf[:, g * H:(g + 1) * H])
        blocks.append(wb[:, g * H:(g + 1) * H])
    return jnp.concatenate(blocks, axis=1)


def pack_params(params, Ks, nf, H):
    """One-time repack (outside the hot path) into kernel-friendly layouts/dtypes."""
    packed = {"embedding": params["embedding"].astype(jnp.bfloat16)}
    w_cols, b_cols = [], []
    for (w, b) in params["convs"]:
        kk, D, _ = w.shape
        w_cols.append(jnp.transpose(w, (1, 0, 2)).reshape(D, kk * nf))
        b_cols.append(b)
    packed["w_cnn"] = jnp.concatenate(w_cols, axis=1).astype(jnp.bfloat16)   # (D, sum(kk)*nf)
    packed["b_cnn"] = jnp.concatenate(b_cols, axis=1)                        # (1, nK*nf) f32

    lstm = []
    zH = jnp.zeros((H, H), jnp.float32)
    for (wif, whf, bf, wib, whb, bb) in params["lstm_layers"]:
        w_in = _interleave_gate_cols(wif, wib, H).astype(jnp.bfloat16)       # (Din, 8H)
        bias = _interleave_gate_cols(bf, bb, H)                              # (1, 8H) f32
        top, bot = [], []
        for g in _GATE_ORDER:
            top += [whf[:, g * H:(g + 1) * H], zH]
            bot += [zH, whb[:, g * H:(g + 1) * H]]
        whh = jnp.concatenate([jnp.concatenate(top, axis=1),
                               jnp.concatenate(bot, axis=1)], axis=0)        # (2H, 8H) f32
        lstm.append((w_in, whh, bias))
    packed["lstm"] = lstm
    return packed


# ------------------------------ pure-JAX reference --------------------------------
def reference_forward(x_tokens, params, *, n_filters, hidden, num_layers):
    hp = "highest"
    emb = params["embedding"][x_tokens]                          # (B, S, D) f32
    B, S, D = emb.shape
    pooled = []
    for (w, b) in params["convs"]:
        kk = w.shape[0]
        L = S - kk + 1
        acc = jnp.zeros((B, L, n_filters), jnp.float32)
        for j in range(kk):
            acc = acc + jnp.einsum("bld,df->blf", emb[:, j:j + L, :], w[j], precision=hp)
        acc = jax.nn.relu(acc + b[None])
        pooled.append(jnp.max(acc, axis=1))
    cnn_y = jnp.concatenate(pooled, axis=1).reshape(B, n_filters, -1)

    x = emb.reshape(S, B, D)                                     # torch .view -- raw reshape
    Hh = hidden
    for (wif, whf, bf, wib, whb, bb) in params["lstm_layers"]:
        def run(xseq, wi, wh, bias):
            h = jnp.zeros((B, Hh), jnp.float32)
            c = jnp.zeros((B, Hh), jnp.float32)
            ys = []
            for t in range(S):
                g = jnp.dot(xseq[t], wi, precision=hp) + jnp.dot(h, wh, precision=hp) + bias
                i = jax.nn.sigmoid(g[:, 0:Hh])
                f = jax.nn.sigmoid(g[:, Hh:2 * Hh])
                gg = jnp.tanh(g[:, 2 * Hh:3 * Hh])
                o = jax.nn.sigmoid(g[:, 3 * Hh:4 * Hh])
                c = f * c + i * gg
                h = o * jnp.tanh(c)
                ys.append(h)
            return jnp.stack(ys, 0)
        yf = run(x, wif, whf, bf)
        yb = run(x[::-1], wib, whb, bb)[::-1]
        x = jnp.concatenate([yf, yb], axis=2)                    # (S, B, 2H)
    bi = jax.nn.relu(x)[S - 1]                                   # relu -> transpose -> [:, -1, :]
    return jnp.concatenate([cnn_y, bi[..., None]], axis=2)


# ------------------------------------ main -----------------------------------------
if __name__ == "__main__":
    # args: words_dict=100, embed_dim=32, n_filters=16, kernel_sizes=(3,4,5),
    #       lstm_hidden_dim=8 (n_filters == 2*H), lstm_num_layers=1
    W, D = 100, 32
    B, S = 2, 16
    nf = 16
    Ks = (3, 4, 5)
    H = 8
    num_layers = 1

    key = jax.random.PRNGKey(0)
    k_tok, k_par = jax.random.split(key)
    x_tokens = jax.random.randint(k_tok, (B, S), 0, W, dtype=jnp.int32)
    params = init_params(k_par, W, D, nf, Ks, H, num_layers)
    packed = pack_params(params, Ks, nf, H)

    fwd = jax.jit(functools.partial(
        sub_cnn_bilstm_forward, packed=packed, Ks=Ks, n_filters=nf,
        hidden=H, num_layers=num_layers))
    out = jax.block_until_ready(fwd(x_tokens))
    assert out.shape == (B, nf, len(Ks) + 1), out.shape
    assert out.dtype == jnp.float32

    ref = jax.jit(functools.partial(
        reference_forward, params=params, n_filters=nf, hidden=H,
        num_layers=num_layers))(x_tokens)
    ref = jax.block_until_ready(ref)
    # bf16 MXU inputs (f32 accumulation) vs. f32-highest reference -> slightly looser atol.
    assert jnp.allclose(out, ref, rtol=2e-2, atol=4e-3), float(jnp.max(jnp.abs(out - ref)))

    print("KERNEL_OK")
</pallas_src>

<mosaic_0001>
module attributes {stable_mosaic.version = 11 : i64} {
  func.func @_fused_kernel(%arg0: memref<32x32xbf16, #tpu.memory_space<vmem>>, %arg1: memref<32x192xbf16, #tpu.memory_space<vmem>>, %arg2: memref<1x48xf32, #tpu.memory_space<vmem>>, %arg3: memref<32x64xbf16, #tpu.memory_space<vmem>>, %arg4: memref<16x64xf32, #tpu.memory_space<vmem>>, %arg5: memref<1x64xf32, #tpu.memory_space<vmem>>, %arg6: memref<2x128xf32, #tpu.memory_space<vmem>>) attributes {dimension_semantics = [], scalar_prefetch = 0 : i64, scratch_operands = 0 : i64, tpu.core_type = #tpu.core_type<tc>} {
    %c0 = arith.constant 0 : index
    %c0_0 = arith.constant 0 : index
    %0 = vector.load %arg0[%c0, %c0_0] : memref<32x32xbf16, #tpu.memory_space<vmem>>, vector<32x32xbf16>
    %c0_1 = arith.constant 0 : index
    %c0_2 = arith.constant 0 : index
    %1 = vector.load %arg1[%c0_1, %c0_2] : memref<32x192xbf16, #tpu.memory_space<vmem>>, vector<32x192xbf16>
    %cst = arith.constant dense<0.000000e+00> : vector<32x192xf32>
    %2 = tpu.matmul %0, %1, %cst {dimension_numbers = #tpu.dot_dimension_numbers<[1], [0], [0], [1], [0, 0, 1, 1], [], []>} : vector<32x32xbf16>, vector<32x192xbf16>, vector<32x192xf32> -> vector<32x192xf32>
    %3 = vector.shape_cast %2 : vector<32x192xf32> to vector<2x16x192xf32>
    %4 = vector.extract_strided_slice %3 {offsets = [0, 0, 0], sizes = [2, 14, 16], strides = [1, 1, 1]} : vector<2x16x192xf32> to vector<2x14x16xf32>
    %5 = vector.extract_strided_slice %3 {offsets = [0, 1, 16], sizes = [2, 14, 16], strides = [1, 1, 1]} : vector<2x16x192xf32> to vector<2x14x16xf32>
    %6 = arith.addf %4, %5 : vector<2x14x16xf32>
    %7 = vector.extract_strided_slice %3 {offsets = [0, 2, 32], sizes = [2, 14, 16], strides = [1, 1, 1]} : vector<2x16x192xf32> to vector<2x14x16xf32>
    %8 = arith.addf %6, %7 : vector<2x14x16xf32>
    %c0_3 = arith.constant 0 : index
    %c0_4 = arith.constant 0 : index
    %9 = vector.load %arg2[%c0_3, %c0_4] : memref<1x48xf32, #tpu.memory_space<vmem>>, vector<1x16xf32>
    %10 = vector.shape_cast %9 : vector<1x16xf32> to vector<1x1x16xf32>
    %11 = vector.broadcast %10 : vector<1x1x16xf32> to vector<2x14x16xf32>
    %12 = arith.addf %8, %11 : vector<2x14x16xf32>
    %cst_5 = arith.constant 0.000000e+00 : f32
    %13 = vector.broadcast %cst_5 : f32 to vector<2x14x16xf32>
    %14 = arith.maximumf %12, %13 : vector<2x14x16xf32>
    %cst_6 = arith.constant dense<0xFF800000> : vector<2x16xf32>
    %15 = vector.multi_reduction <maximumf>, %14, %cst_6 [1] : vector<2x14x16xf32> to vector<2x16xf32>
    %16 = vector.extract_strided_slice %3 {offsets = [0, 0, 48], sizes = [2, 13, 16], strides = [1, 1, 1]} : vector<2x16x192xf32> to vector<2x13x16xf32>
    %17 = vector.extract_strided_slice %3 {offsets = [0, 1, 64], sizes = [2, 13, 16], strides = [1, 1, 1]} : vector<2x16x192xf32> to vector<2x13x16xf32>
    %18 = arith.addf %16, %17 : vector<2x13x16xf32>
    %19 = vector.extract_strided_slice %3 {offsets = [0, 2, 80], sizes = [2, 13, 16], strides = [1, 1, 1]} : vector<2x16x192xf32> to vector<2x13x16xf32>
    %20 = arith.addf %18, %19 : vector<2x13x16xf32>
    %21 = vector.extract_strided_slice %3 {offsets = [0, 3, 96], sizes = [2, 13, 16], strides = [1, 1, 1]} : vector<2x16x192xf32> to vector<2x13x16xf32>
    %22 = arith.addf %20, %21 : vector<2x13x16xf32>
    %c0_7 = arith.constant 0 : index
    %c16 = arith.constant 16 : index
    %23 = vector.load %arg2[%c0_7, %c16] : memref<1x48xf32, #tpu.memory_space<vmem>>, vector<1x16xf32>
    %24 = vector.shape_cast %23 : vector<1x16xf32> to vector<1x1x16xf32>
    %25 = vector.broadcast %24 : vector<1x1x16xf32> to vector<2x13x16xf32>
    %26 = arith.addf %22, %25 : vector<2x13x16xf32>
    %cst_8 = arith.constant 0.000000e+00 : f32
    %27 = vector.broadcast %cst_8 : f32 to vector<2x13x16xf32>
    %28 = arith.maximumf %26, %27 : vector<2x13x16xf32>
    %cst_9 = arith.constant dense<0xFF800000> : vector<2x16xf32>
    %29 = vector.multi_reduction <maximumf>, %28, %cst_9 [1] : vector<2x13x16xf32> to vector<2x16xf32>
    %30 = vector.extract_strided_slice %3 {offsets = [0, 0, 112], sizes = [2, 12, 16], strides = [1, 1, 1]} : vector<2x16x192xf32> to vector<2x12x16xf32>
    %31 = vector.extract_strided_slice %3 {offsets = [0, 1, 128], sizes = [2, 12, 16], strides = [1, 1, 1]} : vector<2x16x192xf32> to vector<2x12x16xf32>
    %32 = arith.addf %30, %31 : vector<2x12x16xf32>
    %33 = vector.extract_strided_slice %3 {offsets = [0, 2, 144], sizes = [2, 12, 16], strides = [1, 1, 1]} : vector<2x16x192xf32> to vector<2x12x16xf32>
    %34 = arith.addf %32, %33 : vector<2x12x16xf32>
    %35 = vector.extract_strided_slice %3 {offsets = [0, 3, 160], sizes = [2, 12, 16], strides = [1, 1, 1]} : vector<2x16x192xf32> to vector<2x12x16xf32>
    %36 = arith.addf %34, %35 : vector<2x12x16xf32>
    %37 = vector.extract_strided_slice %3 {offsets = [0, 4, 176], sizes = [2, 12, 16], strides = [1, 1, 1]} : vector<2x16x192xf32> to vector<2x12x16xf32>
    %38 = arith.addf %36, %37 : vector<2x12x16xf32>
    %c0_10 = arith.constant 0 : index
    %c32 = arith.constant 32 : index
    %39 = vector.load %arg2[%c0_10, %c32] : memref<1x48xf32, #tpu.memory_space<vmem>>, vector<1x16xf32>
    %40 = vector.shape_cast %39 : vector<1x16xf32> to vector<1x1x16xf32>
    %41 = vector.broadcast %40 : vector<1x1x16xf32> to vector<2x12x16xf32>
    %42 = arith.addf %38, %41 : vector<2x12x16xf32>
    %cst_11 = arith.constant 0.000000e+00 : f32
    %43 = vector.broadcast %cst_11 : f32 to vector<2x12x16xf32>
    %44 = arith.maximumf %42, %43 : vector<2x12x16xf32>
    %cst_12 = arith.constant dense<0xFF800000> : vector<2x16xf32>
    %45 = vector.multi_reduction <maximumf>, %44, %cst_12 [1] : vector<2x12x16xf32> to vector<2x16xf32>
    %46 = tpu.iota {dimensions = array<i32: 1>} : vector<2x16xi32>
    %c8_i32 = arith.constant 8 : i32
    %47 = vector.broadcast %c8_i32 : i32 to vector<2x16xi32>
    %48 = arith.cmpi slt, %46, %47 : vector<2x16xi32>
    %49 = tpu.iota {dimensions = array<i32: 1>} : vector<2x64xi32>
    %c16_i32 = arith.constant 16 : i32
    %c0_i32 = arith.constant 0 : i32
    %50 = arith.cmpi eq, %c16_i32, %c0_i32 : i32
    %c1_i32 = arith.constant 1 : i32
    %51 = arith.select %50, %c1_i32, %c16_i32 : i32
    %52 = vector.broadcast %51 : i32 to vector<2x64xi32>
    %53 = arith.remsi %49, %52 : vector<2x64xi32>
    %c0_i32_13 = arith.constant 0 : i32
    %54 = vector.broadcast %c0_i32_13 : i32 to vector<2x64xi32>
    %55 = arith.cmpi ne, %53, %54 : vector<2x64xi32>
    %c0_i32_14 = arith.constant 0 : i32
    %56 = vector.broadcast %c0_i32_14 : i32 to vector<2x64xi32>
    %57 = arith.cmpi slt, %53, %56 : vector<2x64xi32>
    %c0_i32_15 = arith.constant 0 : i32
    %58 = arith.cmpi slt, %51, %c0_i32_15 : i32
    %59 = vector.broadcast %58 : i1 to vector<2x64xi1>
    %60 = vector.broadcast %59 : vector<2x64xi1> to vector<2x64xi1>
    %61 = arith.xori %57, %60 : vector<2x64xi1>
    %62 = arith.andi %61, %55 : vector<2x64xi1>
    %63 = vector.broadcast %51 : i32 to vector<2x64xi32>
    %64 = arith.addi %53, %63 : vector<2x64xi32>
    %65 = arith.select %62, %64, %53 : vector<2x64xi1>, vector<2x64xi32>
    %c8_i32_16 = arith.constant 8 : i32
    %66 = vector.broadcast %c8_i32_16 : i32 to vector<2x64xi32>
    %67 = arith.cmpi slt, %65, %66 : vector<2x64xi32>
    %c0_17 = arith.constant 0 : index
    %c0_18 = arith.constant 0 : index
    %68 = vector.load %arg3[%c0_17, %c0_18] : memref<32x64xbf16, #tpu.memory_space<vmem>>, vector<32x64xbf16>
    %c0_19 = arith.constant 0 : index
    %c0_20 = arith.constant 0 : index
    %69 = vector.load %arg4[%c0_19, %c0_20] : memref<16x64xf32, #tpu.memory_space<vmem>>, vector<16x64xf32>
    %c0_21 = arith.constant 0 : index
    %c0_22 = arith.constant 0 : index
    %70 = vector.load %arg5[%c0_21, %c0_22] : memref<1x64xf32, #tpu.memory_space<vmem>>, vector<1x64xf32>
    %cst_23 = arith.constant dense<0.000000e+00> : vector<32x64xf32>
    %71 = tpu.matmul %0, %68, %cst_23 {dimension_numbers = #tpu.dot_dimension_numbers<[1], [0], [0], [1], [0, 0, 1, 1], [], []>} : vector<32x32xbf16>, vector<32x64xbf16>, vector<32x64xf32> -> vector<32x64xf32>
    %72 = vector.broadcast %70 : vector<1x64xf32> to vector<32x64xf32>
    %73 = arith.addf %71, %72 : vector<32x64xf32>
    %74 = vector.extract_strided_slice %73 {offsets = [0, 0], sizes = [2, 64], strides = [1, 1]} : vector<32x64xf32> to vector<2x64xf32>
    %75 = vector.extract_strided_slice %73 {offsets = [2, 0], sizes = [2, 64], strides = [1, 1]} : vector<32x64xf32> to vector<2x64xf32>
    %76 = vector.extract_strided_slice %73 {offsets = [4, 0], sizes = [2, 64], strides = [1, 1]} : vector<32x64xf32> to vector<2x64xf32>
    %77 = vector.extract_strided_slice %73 {offsets = [6, 0], sizes = [2, 64], strides = [1, 1]} : vector<32x64xf32> to vector<2x64xf32>
    %78 = vector.extract_strided_slice %73 {offsets = [8, 0], sizes = [2, 64], strides = [1, 1]} : vector<32x64xf32> to vector<2x64xf32>
    %79 = vector.extract_strided_slice %73 {offsets = [10, 0], sizes = [2, 64], strides = [1, 1]} : vector<32x64xf32> to vector<2x64xf32>
    %80 = vector.extract_strided_slice %73 {offsets = [12, 0], sizes = [2, 64], strides = [1, 1]} : vector<32x64xf32> to vector<2x64xf32>
    %81 = vector.extract_strided_slice %73 {offsets = [14, 0], sizes = [2, 64], strides = [1, 1]} : vector<32x64xf32> to vector<2x64xf32>
    %82 = vector.extract_strided_slice %73 {offsets = [16, 0], sizes = [2, 64], strides = [1, 1]} : vector<32x64xf32> to vector<2x64xf32>
    %83 = vector.extract_strided_slice %73 {offsets = [18, 0], sizes = [2, 64], strides = [1, 1]} : vector<32x64xf32> to vector<2x64xf32>
    %84 = vector.extract_strided_slice %73 {offsets = [20, 0], sizes = [2, 64], strides = [1, 1]} : vector<32x64xf32> to vector<2x64xf32>
    %85 = vector.extract_strided_slice %73 {offsets = [22, 0], sizes = [2, 64], strides = [1, 1]} : vector<32x64xf32> to vector<2x64xf32>
    %86 = vector.extract_strided_slice %73 {offsets = [24, 0], sizes = [2, 64], strides = [1, 1]} : vector<32x64xf32> to vector<2x64xf32>
    %87 = vector.extract_strided_slice %73 {offsets = [26, 0], sizes = [2, 64], strides = [1, 1]} : vector<32x64xf32> to vector<2x64xf32>
    %88 = vector.extract_strided_slice %73 {offsets = [28, 0], sizes = [2, 64], strides = [1, 1]} : vector<32x64xf32> to vector<2x64xf32>
    %89 = vector.extract_strided_slice %73 {offsets = [30, 0], sizes = [2, 64], strides = [1, 1]} : vector<32x64xf32> to vector<2x64xf32>
    %cst_24 = arith.constant 0.000000e+00 : f32
    %90 = vector.broadcast %cst_24 : f32 to vector<2x16xf32>
    %cst_25 = arith.constant 0.000000e+00 : f32
    %91 = vector.broadcast %cst_25 : f32 to vector<2x16xf32>
    %92 = arith.select %67, %74, %89 : vector<2x64xi1>, vector<2x64xf32>
    %cst_26 = arith.constant dense<0.000000e+00> : vector<2x64xf32>
    %93 = tpu.matmul %90, %69, %cst_26 {dimension_numbers = #tpu.dot_dimension_numbers<[1], [0], [0], [1], [0, 0, 1, 1], [], []>} : vector<2x16xf32>, vector<16x64xf32>, vector<2x64xf32> -> vector<2x64xf32>
    %94 = arith.addf %92, %93 : vector<2x64xf32>
    %95 = vector.extract_strided_slice %94 {offsets = [0, 0], sizes = [2, 48], strides = [1, 1]} : vector<2x64xf32> to vector<2x48xf32>
    %96 = arith.negf %95 : vector<2x48xf32>
    %97 = math.exp %96 : vector<2x48xf32>
    %cst_27 = arith.constant 1.000000e+00 : f32
    %98 = vector.broadcast %cst_27 : f32 to vector<2x48xf32>
    %99 = arith.addf %98, %97 : vector<2x48xf32>
    %100 = arith.divf %98, %99 : vector<2x48xf32>
    %101 = vector.extract_strided_slice %94 {offsets = [0, 48], sizes = [2, 16], strides = [1, 1]} : vector<2x64xf32> to vector<2x16xf32>
    %102 = math.tanh %101 : vector<2x16xf32>
    %103 = vector.extract_strided_slice %100 {offsets = [0, 16], sizes = [2, 16], strides = [1, 1]} : vector<2x48xf32> to vector<2x16xf32>
    %104 = arith.mulf %103, %91 : vector<2x16xf32>
    %105 = vector.extract_strided_slice %100 {offsets = [0, 0], sizes = [2, 16], strides = [1, 1]} : vector<2x48xf32> to vector<2x16xf32>
    %106 = arith.mulf %105, %102 : vector<2x16xf32>
    %107 = arith.addf %104, %106 : vector<2x16xf32>
    %108 = vector.extract_strided_slice %100 {offsets = [0, 32], sizes = [2, 16], strides = [1, 1]} : vector<2x48xf32> to vector<2x16xf32>
    %109 = math.tanh %107 : vector<2x16xf32>
    %110 = arith.mulf %108, %109 : vector<2x16xf32>
    %111 = arith.select %67, %75, %88 : vector<2x64xi1>, vector<2x64xf32>
    %cst_28 = arith.constant dense<0.000000e+00> : vector<2x64xf32>
    %112 = tpu.matmul %110, %69, %cst_28 {dimension_numbers = #tpu.dot_dimension_numbers<[1], [0], [0], [1], [0, 0, 1, 1], [], []>} : vector<2x16xf32>, vector<16x64xf32>, vector<2x64xf32> -> vector<2x64xf32>
    %113 = arith.addf %111, %112 : vector<2x64xf32>
    %114 = vector.extract_strided_slice %113 {offsets = [0, 0], sizes = [2, 48], strides = [1, 1]} : vector<2x64xf32> to vector<2x48xf32>
    %115 = arith.negf %114 : vector<2x48xf32>
    %116 = math.exp %115 : vector<2x48xf32>
    %cst_29 = arith.constant 1.000000e+00 : f32
    %117 = vector.broadcast %cst_29 : f32 to vector<2x48xf32>
    %118 = arith.addf %117, %116 : vector<2x48xf32>
    %119 = arith.divf %117, %118 : vector<2x48xf32>
    %120 = vector.extract_strided_slice %113 {offsets = [0, 48], sizes = [2, 16], strides = [1, 1]} : vector<2x64xf32> to vector<2x16xf32>
    %121 = math.tanh %120 : vector<2x16xf32>
    %122 = vector.extract_strided_slice %119 {offsets = [0, 16], sizes = [2, 16], strides = [1, 1]} : vector<2x48xf32> to vector<2x16xf32>
    %123 = arith.mulf %122, %107 : vector<2x16xf32>
    %124 = vector.extract_strided_slice %119 {offsets = [0, 0], sizes = [2, 16], strides = [1, 1]} : vector<2x48xf32> to vector<2x16xf32>
    %125 = arith.mulf %124, %121 : vector<2x16xf32>
    %126 = arith.addf %123, %125 : vector<2x16xf32>
    %127 = vector.extract_strided_slice %119 {offsets = [0, 32], sizes = [2, 16], strides = [1, 1]} : vector<2x48xf32> to vector<2x16xf32>
    %128 = math.tanh %126 : vector<2x16xf32>
    %129 = arith.mulf %127, %128 : vector<2x16xf32>
    %130 = arith.select %67, %76, %87 : vector<2x64xi1>, vector<2x64xf32>
    %cst_30 = arith.constant dense<0.000000e+00> : vector<2x64xf32>
    %131 = tpu.matmul %129, %69, %cst_30 {dimension_numbers = #tpu.dot_dimension_numbers<[1], [0], [0], [1], [0, 0, 1, 1], [], []>} : vector<2x16xf32>, vector<16x64xf32>, vector<2x64xf32> -> vector<2x64xf32>
    %132 = arith.addf %130, %131 : vector<2x64xf32>
    %133 = vector.extract_strided_slice %132 {offsets = [0, 0], sizes = [2, 48], strides = [1, 1]} : vector<2x64xf32> to vector<2x48xf32>
    %134 = arith.negf %133 : vector<2x48xf32>
    %135 = math.exp %134 : vector<2x48xf32>
    %cst_31 = arith.constant 1.000000e+00 : f32
    %136 = vector.broadcast %cst_31 : f32 to vector<2x48xf32>
    %137 = arith.addf %136, %135 : vector<2x48xf32>
    %138 = arith.divf %136, %137 : vector<2x48xf32>
    %139 = vector.extract_strided_slice %132 {offsets = [0, 48], sizes = [2, 16], strides = [1, 1]} : vector<2x64xf32> to vector<2x16xf32>
    %140 = math.tanh %139 : vector<2x16xf32>
    %141 = vector.extract_strided_slice %138 {offsets = [0, 16], sizes = [2, 16], strides = [1, 1]} : vector<2x48xf32> to vector<2x16xf32>
    %142 = arith.mulf %141, %126 : vector<2x16xf32>
    %143 = vector.extract_strided_slice %138 {offsets = [0, 0], sizes = [2, 16], strides = [1, 1]} : vector<2x48xf32> to vector<2x16xf32>
    %144 = arith.mulf %143, %140 : vector<2x16xf32>
    %145 = arith.addf %142, %144 : vector<2x16xf32>
    %146 = vector.extract_strided_slice %138 {offsets = [0, 32], sizes = [2, 16], strides = [1, 1]} : vector<2x48xf32> to vector<2x16xf32>
    %147 = math.tanh %145 : vector<2x16xf32>
    %148 = arith.mulf %146, %147 : vector<2x16xf32>
    %149 = arith.select %67, %77, %86 : vector<2x64xi1>, vector<2x64xf32>
    %cst_32 = arith.constant dense<0.000000e+00> : vector<2x64xf32>
    %150 = tpu.matmul %148, %69, %cst_32 {dimension_numbers = #tpu.dot_dimension_numbers<[1], [0], [0], [1], [0, 0, 1, 1], [], []>} : vector<2x16xf32>, vector<16x64xf32>, vector<2x64xf32> -> vector<2x64xf32>
    %151 = arith.addf %149, %150 : vector<2x64xf32>
    %152 = vector.extract_strided_slice %151 {offsets = [0, 0], sizes = [2, 48], strides = [1, 1]} : vector<2x64xf32> to vector<2x48xf32>
    %153 = arith.negf %152 : vector<2x48xf32>
    %154 = math.exp %153 : vector<2x48xf32>
    %cst_33 = arith.constant 1.000000e+00 : f32
    %155 = vector.broadcast %cst_33 : f32 to vector<2x48xf32>
    %156 = arith.addf %155, %154 : vector<2x48xf32>
    %157 = arith.divf %155, %156 : vector<2x48xf32>
    %158 = vector.extract_strided_slice %151 {offsets = [0, 48], sizes = [2, 16], strides = [1, 1]} : vector<2x64xf32> to vector<2x16xf32>
    %159 = math.tanh %158 : vector<2x16xf32>
    %160 = vector.extract_strided_slice %157 {offsets = [0, 16], sizes = [2, 16], strides = [1, 1]} : vector<2x48xf32> to vector<2x16xf32>
    %161 = arith.mulf %160, %145 : vector<2x16xf32>
    %162 = vector.extract_strided_slice %157 {offsets = [0, 0], sizes = [2, 16], strides = [1, 1]} : vector<2x48xf32> to vector<2x16xf32>
    %163 = arith.mulf %162, %159 : vector<2x16xf32>
    %164 = arith.addf %161, %163 : vector<2x16xf32>
    %165 = vector.extract_strided_slice %157 {offsets = [0, 32], sizes = [2, 16], strides = [1, 1]} : vector<2x48xf32> to vector<2x16xf32>
    %166 = math.tanh %164 : vector<2x16xf32>
    %167 = arith.mulf %165, %166 : vector<2x16xf32>
    %168 = arith.select %67, %78, %85 : vector<2x64xi1>, vector<2x64xf32>
    %cst_34 = arith.constant dense<0.000000e+00> : vector<2x64xf32>
    %169 = tpu.matmul %167, %69, %cst_34 {dimension_numbers = #tpu.dot_dimension_numbers<[1], [0], [0], [1], [0, 0, 1, 1], [], []>} : vector<2x16xf32>, vector<16x64xf32>, vector<2x64xf32> -> vector<2x64xf32>
    %170 = arith.addf %168, %169 : vector<2x64xf32>
    %171 = vector.extract_strided_slice %170 {offsets = [0, 0], sizes = [2, 48], strides = [1, 1]} : vector<2x64xf32> to vector<2x48xf32>
    %172 = arith.negf %171 : vector<2x48xf32>
    %173 = math.exp %172 : vector<2x48xf32>
    %cst_35 = arith.constant 1.000000e+00 : f32
    %174 = vector.broadcast %cst_35 : f32 to vector<2x48xf32>
    %175 = arith.addf %174, %173 : vector<2x48xf32>
    %176 = arith.divf %174, %175 : vector<2x48xf32>
    %177 = vector.extract_strided_slice %170 {offsets = [0, 48], sizes = [2, 16], strides = [1, 1]} : vector<2x64xf32> to vector<2x16xf32>
    %178 = math.tanh %177 : vector<2x16xf32>
    %179 = vector.extract_strided_slice %176 {offsets = [0, 16], sizes = [2, 16], strides = [1, 1]} : vector<2x48xf32> to vector<2x16xf32>
    %180 = arith.mulf %179, %164 : vector<2x16xf32>
    %181 = vector.extract_strided_slice %176 {offsets = [0, 0], sizes = [2, 16], strides = [1, 1]} : vector<2x48xf32> to vector<2x16xf32>
    %182 = arith.mulf %181, %178 : vector<2x16xf32>
    %183 = arith.addf %180, %182 : vector<2x16xf32>
    %184 = vector.extract_strided_slice %176 {offsets = [0, 32], sizes = [2, 16], strides = [1, 1]} : vector<2x48xf32> to vector<2x16xf32>
    %185 = math.tanh %183 : vector<2x16xf32>
    %186 = arith.mulf %184, %185 : vector<2x16xf32>
    %187 = arith.select %67, %79, %84 : vector<2x64xi1>, vector<2x64xf32>
    %cst_36 = arith.constant dense<0.000000e+00> : vector<2x64xf32>
    %188 = tpu.matmul %186, %69, %cst_36 {dimension_numbers = #tpu.dot_dimension_numbers<[1], [0], [0], [1], [0, 0, 1, 1], [], []>} : vector<2x16xf32>, vector<16x64xf32>, vector<2x64xf32> -> vector<2x64xf32>
    %189 = arith.addf %187, %188 : vector<2x64xf32>
    %190 = vector.extract_strided_slice %189 {offsets = [0, 0], sizes = [2, 48], strides = [1, 1]} : vector<2x64xf32> to vector<2x48xf32>
    %191 = arith.negf %190 : vector<2x48xf32>
    %192 = math.exp %191 : vector<2x48xf32>
    %cst_37 = arith.constant 1.000000e+00 : f32
    %193 = vector.broadcast %cst_37 : f32 to vector<2x48xf32>
    %194 = arith.addf %193, %192 : vector<2x48xf32>
    %195 = arith.divf %193, %194 : vector<2x48xf32>
    %196 = vector.extract_strided_slice %189 {offsets = [0, 48], sizes = [2, 16], strides = [1, 1]} : vector<2x64xf32> to vector<2x16xf32>
    %197 = math.tanh %196 : vector<2x16xf32>
    %198 = vector.extract_strided_slice %195 {offsets = [0, 16], sizes = [2, 16], strides = [1, 1]} : vector<2x48xf32> to vector<2x16xf32>
    %199 = arith.mulf %198, %183 : vector<2x16xf32>
    %200 = vector.extract_strided_slice %195 {offsets = [0, 0], sizes = [2, 16], strides = [1, 1]} : vector<2x48xf32> to vector<2x16xf32>
    %201 = arith.mulf %200, %197 : vector<2x16xf32>
    %202 = arith.addf %199, %201 : vector<2x16xf32>
    %203 = vector.extract_strided_slice %195 {offsets = [0, 32], sizes = [2, 16], strides = [1, 1]} : vector<2x48xf32> to vector<2x16xf32>
    %204 = math.tanh %202 : vector<2x16xf32>
    %205 = arith.mulf %203, %204 : vector<2x16xf32>
    %206 = arith.select %67, %80, %83 : vector<2x64xi1>, vector<2x64xf32>
    %cst_38 = arith.constant dense<0.000000e+00> : vector<2x64xf32>
    %207 = tpu.matmul %205, %69, %cst_38 {dimension_numbers = #tpu.dot_dimension_numbers<[1], [0], [0], [1], [0, 0, 1, 1], [], []>} : vector<2x16xf32>, vector<16x64xf32>, vector<2x64xf32> -> vector<2x64xf32>
    %208 = arith.addf %206, %207 : vector<2x64xf32>
    %209 = vector.extract_strided_slice %208 {offsets = [0, 0], sizes = [2, 48], strides = [1, 1]} : vector<2x64xf32> to vector<2x48xf32>
    %210 = arith.negf %209 : vector<2x48xf32>
    %211 = math.exp %210 : vector<2x48xf32>
    %cst_39 = arith.constant 1.000000e+00 : f32
    %212 = vector.broadcast %cst_39 : f32 to vector<2x48xf32>
    %213 = arith.addf %212, %211 : vector<2x48xf32>
    %214 = arith.divf %212, %213 : vector<2x48xf32>
    %215 = vector.extract_strided_slice %208 {offsets = [0, 48], sizes = [2, 16], strides = [1, 1]} : vector<2x64xf32> to vector<2x16xf32>
    %216 = math.tanh %215 : vector<2x16xf32>
    %217 = vector.extract_strided_slice %214 {offsets = [0, 16], sizes = [2, 16], strides = [1, 1]} : vector<2x48xf32> to vector<2x16xf32>
    %218 = arith.mulf %217, %202 : vector<2x16xf32>
    %219 = vector.extract_strided_slice %214 {offsets = [0, 0], sizes = [2, 16], strides = [1, 1]} : vector<2x48xf32> to vector<2x16xf32>
    %220 = arith.mulf %219, %216 : vector<2x16xf32>
    %221 = arith.addf %218, %220 : vector<2x16xf32>
    %222 = vector.extract_strided_slice %214 {offsets = [0, 32], sizes = [2, 16], strides = [1, 1]} : vector<2x48xf32> to vector<2x16xf32>
    %223 = math.tanh %221 : vector<2x16xf32>
    %224 = arith.mulf %222, %223 : vector<2x16xf32>
    %225 = arith.select %67, %81, %82 : vector<2x64xi1>, vector<2x64xf32>
    %cst_40 = arith.constant dense<0.000000e+00> : vector<2x64xf32>
    %226 = tpu.matmul %224, %69, %cst_40 {dimension_numbers = #tpu.dot_dimension_numbers<[1], [0], [0], [1], [0, 0, 1, 1], [], []>} : vector<2x16xf32>, vector<16x64xf32>, vector<2x64xf32> -> vector<2x64xf32>
    %227 = arith.addf %225, %226 : vector<2x64xf32>
    %228 = vector.extract_strided_slice %227 {offsets = [0, 0], sizes = [2, 48], strides = [1, 1]} : vector<2x64xf32> to vector<2x48xf32>
    %229 = arith.negf %228 : vector<2x48xf32>
    %230 = math.exp %229 : vector<2x48xf32>
    %cst_41 = arith.constant 1.000000e+00 : f32
    %231 = vector.broadcast %cst_41 : f32 to vector<2x48xf32>
    %232 = arith.addf %231, %230 : vector<2x48xf32>
    %233 = arith.divf %231, %232 : vector<2x48xf32>
    %234 = vector.extract_strided_slice %227 {offsets = [0, 48], sizes = [2, 16], strides = [1, 1]} : vector<2x64xf32> to vector<2x16xf32>
    %235 = math.tanh %234 : vector<2x16xf32>
    %236 = vector.extract_strided_slice %233 {offsets = [0, 16], sizes = [2, 16], strides = [1, 1]} : vector<2x48xf32> to vector<2x16xf32>
    %237 = arith.mulf %236, %221 : vector<2x16xf32>
    %238 = vector.extract_strided_slice %233 {offsets = [0, 0], sizes = [2, 16], strides = [1, 1]} : vector<2x48xf32> to vector<2x16xf32>
    %239 = arith.mulf %238, %235 : vector<2x16xf32>
    %240 = arith.addf %237, %239 : vector<2x16xf32>
    %241 = vector.extract_strided_slice %233 {offsets = [0, 32], sizes = [2, 16], strides = [1, 1]} : vector<2x48xf32> to vector<2x16xf32>
    %242 = math.tanh %240 : vector<2x16xf32>
    %243 = arith.mulf %241, %242 : vector<2x16xf32>
    %244 = arith.select %67, %82, %81 : vector<2x64xi1>, vector<2x64xf32>
    %cst_42 = arith.constant dense<0.000000e+00> : vector<2x64xf32>
    %245 = tpu.matmul %243, %69, %cst_42 {dimension_numbers = #tpu.dot_dimension_numbers<[1], [0], [0], [1], [0, 0, 1, 1], [], []>} : vector<2x16xf32>, vector<16x64xf32>, vector<2x64xf32> -> vector<2x64xf32>
    %246 = arith.addf %244, %245 : vector<2x64xf32>
    %247 = vector.extract_strided_slice %246 {offsets = [0, 0], sizes = [2, 48], strides = [1, 1]} : vector<2x64xf32> to vector<2x48xf32>
    %248 = arith.negf %247 : vector<2x48xf32>
    %249 = math.exp %248 : vector<2x48xf32>
    %cst_43 = arith.constant 1.000000e+00 : f32
    %250 = vector.broadcast %cst_43 : f32 to vector<2x48xf32>
    %251 = arith.addf %250, %249 : vector<2x48xf32>
    %252 = arith.divf %250, %251 : vector<2x48xf32>
    %253 = vector.extract_strided_slice %246 {offsets = [0, 48], sizes = [2, 16], strides = [1, 1]} : vector<2x64xf32> to vector<2x16xf32>
    %254 = math.tanh %253 : vector<2x16xf32>
    %255 = vector.extract_strided_slice %252 {offsets = [0, 16], sizes = [2, 16], strides = [1, 1]} : vector<2x48xf32> to vector<2x16xf32>
    %256 = arith.mulf %255, %240 : vector<2x16xf32>
    %257 = vector.extract_strided_slice %252 {offsets = [0, 0], sizes = [2, 16], strides = [1, 1]} : vector<2x48xf32> to vector<2x16xf32>
    %258 = arith.mulf %257, %254 : vector<2x16xf32>
    %259 = arith.addf %256, %258 : vector<2x16xf32>
    %260 = vector.extract_strided_slice %252 {offsets = [0, 32], sizes = [2, 16], strides = [1, 1]} : vector<2x48xf32> to vector<2x16xf32>
    %261 = math.tanh %259 : vector<2x16xf32>
    %262 = arith.mulf %260, %261 : vector<2x16xf32>
    %263 = arith.select %67, %83, %80 : vector<2x64xi1>, vector<2x64xf32>
    %cst_44 = arith.constant dense<0.000000e+00> : vector<2x64xf32>
    %264 = tpu.matmul %262, %69, %cst_44 {dimension_numbers = #tpu.dot_dimension_numbers<[1], [0], [0], [1], [0, 0, 1, 1], [], []>} : vector<2x16xf32>, vector<16x64xf32>, vector<2x64xf32> -> vector<2x64xf32>
    %265 = arith.addf %263, %264 : vector<2x64xf32>
    %266 = vector.extract_strided_slice %265 {offsets = [0, 0], sizes = [2, 48], strides = [1, 1]} : vector<2x64xf32> to vector<2x48xf32>
    %267 = arith.negf %266 : vector<2x48xf32>
    %268 = math.exp %267 : vector<2x48xf32>
    %cst_45 = arith.constant 1.000000e+00 : f32
    %269 = vector.broadcast %cst_45 : f32 to vector<2x48xf32>
    %270 = arith.addf %269, %268 : vector<2x48xf32>
    %271 = arith.divf %269, %270 : vector<2x48xf32>
    %272 = vector.extract_strided_slice %265 {offsets = [0, 48], sizes = [2, 16], strides = [1, 1]} : vector<2x64xf32> to vector<2x16xf32>
    %273 = math.tanh %272 : vector<2x16xf32>
    %274 = vector.extract_strided_slice %271 {offsets = [0, 16], sizes = [2, 16], strides = [1, 1]} : vector<2x48xf32> to vector<2x16xf32>
    %275 = arith.mulf %274, %259 : vector<2x16xf32>
    %276 = vector.extract_strided_slice %271 {offsets = [0, 0], sizes = [2, 16], strides = [1, 1]} : vector<2x48xf32> to vector<2x16xf32>
    %277 = arith.mulf %276, %273 : vector<2x16xf32>
    %278 = arith.addf %275, %277 : vector<2x16xf32>
    %279 = vector.extract_strided_slice %271 {offsets = [0, 32], sizes = [2, 16], strides = [1, 1]} : vector<2x48xf32> to vector<2x16xf32>
    %280 = math.tanh %278 : vector<2x16xf32>
    %281 = arith.mulf %279, %280 : vector<2x16xf32>
    %282 = arith.select %67, %84, %79 : vector<2x64xi1>, vector<2x64xf32>
    %cst_46 = arith.constant dense<0.000000e+00> : vector<2x64xf32>
    %283 = tpu.matmul %281, %69, %cst_46 {dimension_numbers = #tpu.dot_dimension_numbers<[1], [0], [0], [1], [0, 0, 1, 1], [], []>} : vector<2x16xf32>, vector<16x64xf32>, vector<2x64xf32> -> vector<2x64xf32>
    %284 = arith.addf %282, %283 : vector<2x64xf32>
    %285 = vector.extract_strided_slice %284 {offsets = [0, 0], sizes = [2, 48], strides = [1, 1]} : vector<2x64xf32> to vector<2x48xf32>
    %286 = arith.negf %285 : vector<2x48xf32>
    %287 = math.exp %286 : vector<2x48xf32>
    %cst_47 = arith.constant 1.000000e+00 : f32
    %288 = vector.broadcast %cst_47 : f32 to vector<2x48xf32>
    %289 = arith.addf %288, %287 : vector<2x48xf32>
    %290 = arith.divf %288, %289 : vector<2x48xf32>
    %291 = vector.extract_strided_slice %284 {offsets = [0, 48], sizes = [2, 16], strides = [1, 1]} : vector<2x64xf32> to vector<2x16xf32>
    %292 = math.tanh %291 : vector<2x16xf32>
    %293 = vector.extract_strided_slice %290 {offsets = [0, 16], sizes = [2, 16], strides = [1, 1]} : vector<2x48xf32> to vector<2x16xf32>
    %294 = arith.mulf %293, %278 : vector<2x16xf32>
    %295 = vector.extract_strided_slice %290 {offsets = [0, 0], sizes = [2, 16], strides = [1, 1]} : vector<2x48xf32> to vector<2x16xf32>
    %296 = arith.mulf %295, %292 : vector<2x16xf32>
    %297 = arith.addf %294, %296 : vector<2x16xf32>
    %298 = vector.extract_strided_slice %290 {offsets = [0, 32], sizes = [2, 16], strides = [1, 1]} : vector<2x48xf32> to vector<2x16xf32>
    %299 = math.tanh %297 : vector<2x16xf32>
    %300 = arith.mulf %298, %299 : vector<2x16xf32>
    %301 = arith.select %67, %85, %78 : vector<2x64xi1>, vector<2x64xf32>
    %cst_48 = arith.constant dense<0.000000e+00> : vector<2x64xf32>
    %302 = tpu.matmul %300, %69, %cst_48 {dimension_numbers = #tpu.dot_dimension_numbers<[1], [0], [0], [1], [0, 0, 1, 1], [], []>} : vector<2x16xf32>, vector<16x64xf32>, vector<2x64xf32> -> vector<2x64xf32>
    %303 = arith.addf %301, %302 : vector<2x64xf32>
    %304 = vector.extract_strided_slice %303 {offsets = [0, 0], sizes = [2, 48], strides = [1, 1]} : vector<2x64xf32> to vector<2x48xf32>
    %305 = arith.negf %304 : vector<2x48xf32>
    %306 = math.exp %305 : vector<2x48xf32>
    %cst_49 = arith.constant 1.000000e+00 : f32
    %307 = vector.broadcast %cst_49 : f32 to vector<2x48xf32>
    %308 = arith.addf %307, %306 : vector<2x48xf32>
    %309 = arith.divf %307, %308 : vector<2x48xf32>
    %310 = vector.extract_strided_slice %303 {offsets = [0, 48], sizes = [2, 16], strides = [1, 1]} : vector<2x64xf32> to vector<2x16xf32>
    %311 = math.tanh %310 : vector<2x16xf32>
    %312 = vector.extract_strided_slice %309 {offsets = [0, 16], sizes = [2, 16], strides = [1, 1]} : vector<2x48xf32> to vector<2x16xf32>
    %313 = arith.mulf %312, %297 : vector<2x16xf32>
    %314 = vector.extract_strided_slice %309 {offsets = [0, 0], sizes = [2, 16], strides = [1, 1]} : vector<2x48xf32> to vector<2x16xf32>
    %315 = arith.mulf %314, %311 : vector<2x16xf32>
    %316 = arith.addf %313, %315 : vector<2x16xf32>
    %317 = vector.extract_strided_slice %309 {offsets = [0, 32], sizes = [2, 16], strides = [1, 1]} : vector<2x48xf32> to vector<2x16xf32>
    %318 = math.tanh %316 : vector<2x16xf32>
    %319 = arith.mulf %317, %318 : vector<2x16xf32>
    %320 = arith.select %67, %86, %77 : vector<2x64xi1>, vector<2x64xf32>
    %cst_50 = arith.constant dense<0.000000e+00> : vector<2x64xf32>
    %321 = tpu.matmul %319, %69, %cst_50 {dimension_numbers = #tpu.dot_dimension_numbers<[1], [0], [0], [1], [0, 0, 1, 1], [], []>} : vector<2x16xf32>, vector<16x64xf32>, vector<2x64xf32> -> vector<2x64xf32>
    %322 = arith.addf %320, %321 : vector<2x64xf32>
    %323 = vector.extract_strided_slice %322 {offsets = [0, 0], sizes = [2, 48], strides = [1, 1]} : vector<2x64xf32> to vector<2x48xf32>
    %324 = arith.negf %323 : vector<2x48xf32>
    %325 = math.exp %324 : vector<2x48xf32>
    %cst_51 = arith.constant 1.000000e+00 : f32
    %326 = vector.broadcast %cst_51 : f32 to vector<2x48xf32>
    %327 = arith.addf %326, %325 : vector<2x48xf32>
    %328 = arith.divf %326, %327 : vector<2x48xf32>
    %329 = vector.extract_strided_slice %322 {offsets = [0, 48], sizes = [2, 16], strides = [1, 1]} : vector<2x64xf32> to vector<2x16xf32>
    %330 = math.tanh %329 : vector<2x16xf32>
    %331 = vector.extract_strided_slice %328 {offsets = [0, 16], sizes = [2, 16], strides = [1, 1]} : vector<2x48xf32> to vector<2x16xf32>
    %332 = arith.mulf %331, %316 : vector<2x16xf32>
    %333 = vector.extract_strided_slice %328 {offsets = [0, 0], sizes = [2, 16], strides = [1, 1]} : vector<2x48xf32> to vector<2x16xf32>
    %334 = arith.mulf %333, %330 : vector<2x16xf32>
    %335 = arith.addf %332, %334 : vector<2x16xf32>
    %336 = vector.extract_strided_slice %328 {offsets = [0, 32], sizes = [2, 16], strides = [1, 1]} : vector<2x48xf32> to vector<2x16xf32>
    %337 = math.tanh %335 : vector<2x16xf32>
    %338 = arith.mulf %336, %337 : vector<2x16xf32>
    %339 = arith.select %67, %87, %76 : vector<2x64xi1>, vector<2x64xf32>
    %cst_52 = arith.constant dense<0.000000e+00> : vector<2x64xf32>
    %340 = tpu.matmul %338, %69, %cst_52 {dimension_numbers = #tpu.dot_dimension_numbers<[1], [0], [0], [1], [0, 0, 1, 1], [], []>} : vector<2x16xf32>, vector<16x64xf32>, vector<2x64xf32> -> vector<2x64xf32>
    %341 = arith.addf %339, %340 : vector<2x64xf32>
    %342 = vector.extract_strided_slice %341 {offsets = [0, 0], sizes = [2, 48], strides = [1, 1]} : vector<2x64xf32> to vector<2x48xf32>
    %343 = arith.negf %342 : vector<2x48xf32>
    %344 = math.exp %343 : vector<2x48xf32>
    %cst_53 = arith.constant 1.000000e+00 : f32
    %345 = vector.broadcast %cst_53 : f32 to vector<2x48xf32>
    %346 = arith.addf %345, %344 : vector<2x48xf32>
    %347 = arith.divf %345, %346 : vector<2x48xf32>
    %348 = vector.extract_strided_slice %341 {offsets = [0, 48], sizes = [2, 16], strides = [1, 1]} : vector<2x64xf32> to vector<2x16xf32>
    %349 = math.tanh %348 : vector<2x16xf32>
    %350 = vector.extract_strided_slice %347 {offsets = [0, 16], sizes = [2, 16], strides = [1, 1]} : vector<2x48xf32> to vector<2x16xf32>
    %351 = arith.mulf %350, %335 : vector<2x16xf32>
    %352 = vector.extract_strided_slice %347 {offsets = [0, 0], sizes = [2, 16], strides = [1, 1]} : vector<2x48xf32> to vector<2x16xf32>
    %353 = arith.mulf %352, %349 : vector<2x16xf32>
    %354 = arith.addf %351, %353 : vector<2x16xf32>
    %355 = vector.extract_strided_slice %347 {offsets = [0, 32], sizes = [2, 16], strides = [1, 1]} : vector<2x48xf32> to vector<2x16xf32>
    %356 = math.tanh %354 : vector<2x16xf32>
    %357 = arith.mulf %355, %356 : vector<2x16xf32>
    %358 = arith.select %67, %88, %75 : vector<2x64xi1>, vector<2x64xf32>
    %cst_54 = arith.constant dense<0.000000e+00> : vector<2x64xf32>
    %359 = tpu.matmul %357, %69, %cst_54 {dimension_numbers = #tpu.dot_dimension_numbers<[1], [0], [0], [1], [0, 0, 1, 1], [], []>} : vector<2x16xf32>, vector<16x64xf32>, vector<2x64xf32> -> vector<2x64xf32>
    %360 = arith.addf %358, %359 : vector<2x64xf32>
    %361 = vector.extract_strided_slice %360 {offsets = [0, 0], sizes = [2, 48], strides = [1, 1]} : vector<2x64xf32> to vector<2x48xf32>
    %362 = arith.negf %361 : vector<2x48xf32>
    %363 = math.exp %362 : vector<2x48xf32>
    %cst_55 = arith.constant 1.000000e+00 : f32
    %364 = vector.broadcast %cst_55 : f32 to vector<2x48xf32>
    %365 = arith.addf %364, %363 : vector<2x48xf32>
    %366 = arith.divf %364, %365 : vector<2x48xf32>
    %367 = vector.extract_strided_slice %360 {offsets = [0, 48], sizes = [2, 16], strides = [1, 1]} : vector<2x64xf32> to vector<2x16xf32>
    %368 = math.tanh %367 : vector<2x16xf32>
    %369 = vector.extract_strided_slice %366 {offsets = [0, 16], sizes = [2, 16], strides = [1, 1]} : vector<2x48xf32> to vector<2x16xf32>
    %370 = arith.mulf %369, %354 : vector<2x16xf32>
    %371 = vector.extract_strided_slice %366 {offsets = [0, 0], sizes = [2, 16], strides = [1, 1]} : vector<2x48xf32> to vector<2x16xf32>
    %372 = arith.mulf %371, %368 : vector<2x16xf32>
    %373 = arith.addf %370, %372 : vector<2x16xf32>
    %374 = vector.extract_strided_slice %366 {offsets = [0, 32], sizes = [2, 16], strides = [1, 1]} : vector<2x48xf32> to vector<2x16xf32>
    %375 = math.tanh %373 : vector<2x16xf32>
    %376 = arith.mulf %374, %375 : vector<2x16xf32>
    %377 = arith.select %67, %89, %74 : vector<2x64xi1>, vector<2x64xf32>
    %cst_56 = arith.constant dense<0.000000e+00> : vector<2x64xf32>
    %378 = tpu.matmul %376, %69, %cst_56 {dimension_numbers = #tpu.dot_dimension_numbers<[1], [0], [0], [1], [0, 0, 1, 1], [], []>} : vector<2x16xf32>, vector<16x64xf32>, vector<2x64xf32> -> vector<2x64xf32>
    %379 = arith.addf %377, %378 : vector<2x64xf32>
    %380 = vector.extract_strided_slice %379 {offsets = [0, 0], sizes = [2, 48], strides = [1, 1]} : vector<2x64xf32> to vector<2x48xf32>
    %381 = arith.negf %380 : vector<2x48xf32>
    %382 = math.exp %381 : vector<2x48xf32>
    %cst_57 = arith.constant 1.000000e+00 : f32
    %383 = vector.broadcast %cst_57 : f32 to vector<2x48xf32>
    %384 = arith.addf %383, %382 : vector<2x48xf32>
    %385 = arith.divf %383, %384 : vector<2x48xf32>
    %386 = vector.extract_strided_slice %379 {offsets = [0, 48], sizes = [2, 16], strides = [1, 1]} : vector<2x64xf32> to vector<2x16xf32>
    %387 = math.tanh %386 : vector<2x16xf32>
    %388 = vector.extract_strided_slice %385 {offsets = [0, 16], sizes = [2, 16], strides = [1, 1]} : vector<2x48xf32> to vector<2x16xf32>
    %389 = arith.mulf %388, %373 : vector<2x16xf32>
    %390 = vector.extract_strided_slice %385 {offsets = [0, 0], sizes = [2, 16], strides = [1, 1]} : vector<2x48xf32> to vector<2x16xf32>
    %391 = arith.mulf %390, %387 : vector<2x16xf32>
    %392 = arith.addf %389, %391 : vector<2x16xf32>
    %393 = vector.extract_strided_slice %385 {offsets = [0, 32], sizes = [2, 16], strides = [1, 1]} : vector<2x48xf32> to vector<2x16xf32>
    %394 = math.tanh %392 : vector<2x16xf32>
    %395 = arith.mulf %393, %394 : vector<2x16xf32>
    %396 = arith.select %48, %395, %110 : vector<2x16xi1>, vector<2x16xf32>
    %cst_58 = arith.constant 0.000000e+00 : f32
    %397 = vector.broadcast %cst_58 : f32 to vector<2x16xf32>
    %398 = arith.maximumf %396, %397 : vector<2x16xf32>
    %cst_59 = arith.constant 0.000000e+00 : f32
    %399 = vector.broadcast %cst_59 : f32 to vector<2x64xf32>
    %400 = tpu.concatenate %15, %29, %45, %398, %399 in 1 : vector<2x16xf32>, vector<2x16xf32>, vector<2x16xf32>, vector<2x16xf32>, vector<2x64xf32> -> vector<2x128xf32>
    %c0_60 = arith.constant 0 : index
    %c0_61 = arith.constant 0 : index
    %401 = vector.load %arg6[%c0_60, %c0_61] : memref<2x128xf32, #tpu.memory_space<vmem>>, vector<2x128xf32>
    tpu.vector_store %arg6[%c0_60, %c0_61], %400 {strides = array<i32>} : memref<2x128xf32, #tpu.memory_space<vmem>>, vector<2x128xf32>,
    return
  }
}

</mosaic_0001>

<llo_original>
// kernel: sub_cnn_bilstm_forward.1
$region0: #{sub_cnn_bilstm_forward.1}
  #allocation0 [shape = 'u32[]', space=smem, size = 0x4, offset = 0x4, fixed_abs, tag = 'smem constant byte address 0x4 - core index']
  #allocation1 [shape = 'u32[144,128]{1,0:T(1,128)}', space=vmem, size = 0x12000, scoped, tag = 'internal scratch']
  %s0 = inlined_call_operand.vmem [shape: bf16[32,32], index: 0, kind: input, shape index: {}]
  %s1 = inlined_call_operand.vmem [shape: bf16[32,192], index: 1, kind: input, shape index: {}]
  %s2 = inlined_call_operand.vmem [shape: f32[1,48], index: 2, kind: input, shape index: {}]
  %s3 = inlined_call_operand.vmem [shape: bf16[32,64], index: 3, kind: input, shape index: {}]
  %s4 = inlined_call_operand.vmem [shape: f32[16,64], index: 4, kind: input, shape index: {}]
  %s5 = inlined_call_operand.vmem [shape: f32[1,64], index: 5, kind: input, shape index: {}]
  %s6 = inlined_call_operand.vmem [shape: f32[2,128], index: 6, kind: output, shape index: {}]
  %s7 = sld [smem:[#allocation0]]
  $region34: #{sub_cnn_bilstm_forward.1} parent=0
    _
  %s9 = ssub.s32 1, %s7
  %s10 = scalar_select 0, %s9, %s7
  // Predicated region
  $region2: #{sub_cnn_bilstm_forward.1} parent=0 // pred_check
    _
  $region3: #{sub_cnn_bilstm_forward.1} parent=0 // pred_check_branch
    %12 = sbr.rel (0) target = $region5
  $region4: #{sub_cnn_bilstm_forward.1} parent=0 // pred_region
    _
  $region5: #{sub_cnn_bilstm_forward.1} parent=0 // pred_fallthru
    _
  // Predicated region
  $region6: #{sub_cnn_bilstm_forward.1} parent=0 // pred_check
    _
  $region7: #{sub_cnn_bilstm_forward.1} parent=0 // pred_check_branch
    %14 = sbr.rel (0) target = $region9
  $region8: #{sub_cnn_bilstm_forward.1} parent=0 // pred_region
    _
  $region9: #{sub_cnn_bilstm_forward.1} parent=0 // pred_fallthru
    _
  // Predicated region
  $region10: #{sub_cnn_bilstm_forward.1} parent=0 // pred_check
    _
  $region11: #{sub_cnn_bilstm_forward.1} parent=0 // pred_check_branch
    %16 = sbr.rel (0) target = $region13
  $region12: #{sub_cnn_bilstm_forward.1} parent=0 // pred_region
    _
  $region13: #{sub_cnn_bilstm_forward.1} parent=0 // pred_fallthru
    _
  // Predicated region
  $region14: #{sub_cnn_bilstm_forward.1} parent=0 // pred_check
    _
  $region15: #{sub_cnn_bilstm_forward.1} parent=0 // pred_check_branch
    %18 = sbr.rel (0) target = $region17
  $region16: #{sub_cnn_bilstm_forward.1} parent=0 // pred_region
    _
  $region17: #{sub_cnn_bilstm_forward.1} parent=0 // pred_fallthru
    _
  // Predicated region
  $region18: #{sub_cnn_bilstm_forward.1} parent=0 // pred_check
    _
  $region19: #{sub_cnn_bilstm_forward.1} parent=0 // pred_check_branch
    %20 = sbr.rel (0) target = $region21
  $region20: #{sub_cnn_bilstm_forward.1} parent=0 // pred_region
    _
  $region21: #{sub_cnn_bilstm_forward.1} parent=0 // pred_fallthru
    _
  // Predicated region
  $region22: #{sub_cnn_bilstm_forward.1} parent=0 // pred_check
    _
  $region23: #{sub_cnn_bilstm_forward.1} parent=0 // pred_check_branch
    %22 = sbr.rel (0) target = $region25
  $region24: #{sub_cnn_bilstm_forward.1} parent=0 // pred_region
    _
  $region25: #{sub_cnn_bilstm_forward.1} parent=0 // pred_fallthru
    _
  %v24 = vld [vmem:[%s0] sm:$0xf]
  %v25 = vld [vmem:[%s0 + $0x4] sm:$0xf]
  %v26 = vld [vmem:[%s0 + $0x8] sm:$0xf]
  %v27 = vld [vmem:[%s0 + $0xc] sm:$0xf]
  %v28 = vld [vmem:[%s1] sm:$0xff]
  %v29 = vld [vmem:[%s1 + $0x8] sm:$0xff]
  %v30 = vld [vmem:[%s1 + $0x10] sm:$0xff]
  %v31 = vld [vmem:[%s1 + $0x18] sm:$0xff]
  %v36 = vunpack.c.l.b16 %v24
  %v37 = vunpack.c.l.b16 %v25
  %v38 = vunpack.c.l.b16 %v26
  %v39 = vunpack.c.l.b16 %v27
  %v40 = vpack.c.b16 %v37, %v36
  %v41 = vpack.c.b16 %v39, %v38
  %v46 = vunpack.c.l.b16 %v28
  %v47 = vunpack.c.h.b16 %v28
  %v48 = vunpack.c.l.b16 %v29
  %v49 = vunpack.c.h.b16 %v29
  %v50 = vunpack.c.l.b16 %v30
  %v51 = vunpack.c.h.b16 %v30
  %v52 = vunpack.c.l.b16 %v31
  %v53 = vunpack.c.h.b16 %v31
  %v54 = vpack.c.b16 %v48, %v46
  %v55 = vpack.c.b16 %v49, %v47
  %v56 = vpack.c.b16 %v52, %v50
  %v57 = vpack.c.b16 %v53, %v51
  %vm62 = vcmask 261120
  %v64 = vsel %vm62, %v40, 0
  %v67 = vsel %vm62, %v41, 0
  %69 = vmatprep.subr.bf16.mxu0 %v55
  %70 = vmatpush1.bf16.msra.mxu0 %v54
  %71 = vmatprep.subr.bf16.mxu0 %v57
  %72 = vmatpush1.bf16.msra.mxu0 %v56
  %73 = vmatprep.subr.bf16.mxu0 0
  %74 = vmatpush1.bf16.msra.mxu0 0
  %75 = vmatprep.subr.bf16.mxu0 0
  %76 = vmatpush1.bf16.msra.mxu0 0
  %77 = vmatprep.subr.bf16.mxu0 0
  %78 = vmatpush1.bf16.msra.mxu0 0
  %79 = vmatprep.subr.bf16.mxu0 0
  %80 = vmatpush1.bf16.msra.mxu0 0
  %81 = vmatprep.subr.bf16.mxu0 0
  %82 = vmatpush1.bf16.msra.mxu0 0
  %83 = vmatprep.subr.bf16.mxu0 0
  %84 = vmatpush1.bf16.msra.mxu0 0
  %85 = vmatprep.subr.bf16.mxu0 0
  %86 = vmatpush1.bf16.msra.mxu0 0
  %87 = vmatprep.subr.bf16.mxu0 0
  %88 = vmatpush1.bf16.msra.mxu0 0
  %89 = vmatprep.subr.bf16.mxu0 0
  %90 = vmatpush1.bf16.msra.mxu0 0
  %91 = vmatprep.subr.bf16.mxu0 0
  %92 = vmatpush1.bf16.msra.mxu0 0
  %93 = vmatprep.subr.bf16.mxu0 0
  %94 = vmatpush1.bf16.msra.mxu0 0
  %95 = vmatprep.subr.bf16.mxu0 0
  %96 = vmatpush1.bf16.msra.mxu0 0
  %97 = vmatprep.subr.bf16.mxu0 0
  %98 = vmatpush1.bf16.msra.mxu0 0
  %99 = vmatprep.subr.bf16.mxu0 0
  %100 = vmatpush1.bf16.msra.mxu0 0
  %101 = vmatprep.mubr.bf16.mxu0 0
  %102 = vmatmul.mubr.bf16.gmra.mrb[0].mxu0 %v64
  %v103 = vpop.f32.mrb[0].mxu0
  %v104 = vadd.f32 0.0, %v103
  %v105 = vpop.f32.mrb[0].mxu0
  %v106 = vadd.f32 0.0, %v105
  %v107 = vpop.f32.mrb[0].mxu0
  %v108 = vadd.f32 0.0, %v107
  %v109 = vpop.f32.mrb[0].mxu0
  %v110 = vadd.f32 0.0, %v109
  %111 = vmatprep.mubr.bf16.mxu0 0
  %112 = vmatmul.mubr.bf16.gmra.mrb[0].mxu0 %v67
  %v113 = vpop.f32.mrb[0].mxu0
  %v114 = vadd.f32 0.0, %v113
  %v115 = vpop.f32.mrb[0].mxu0
  %v116 = vadd.f32 0.0, %v115
  %v117 = vpop.f32.mrb[0].mxu0
  %v118 = vadd.f32 0.0, %v117
  %v119 = vpop.f32.mrb[0].mxu0
  %v120 = vadd.f32 0.0, %v119
  %121 = vdwg.mxu0
  %vm126 = vcmask 1046528
  %v127 = vrot.slane %v104, 1
  %v128 = vrot.slane %v108, 1
  %v129 = vsel %vm126, %v127, %v128
  %v130 = vrot.slane %v114, 1
  %v131 = vrot.slane %v118, 1
  %v132 = vsel %vm126, %v130, %v131
  %133 = vrot.lane.b32.xlu0 %v129, 112
  %v134 = vpop.permute.xlu0 %133
  %135 = vrot.lane.b32.xlu0 %v128, 112
  %v136 = vpop.permute.xlu0 %135
  %137 = vrot.lane.b32.xlu0 %v132, 112
  %v138 = vpop.permute.xlu0 %137
  %139 = vrot.lane.b32.xlu0 %v131, 112
  %v140 = vpop.permute.xlu0 %139
  %v145 = vadd.f32 %v104, %v134
  %v146 = vadd.f32 %v108, %v136
  %v147 = vadd.f32 %v114, %v138
  %v148 = vadd.f32 %v118, %v140
  %vm149 = vcmask 1045504
  %v150 = vrot.slane %v104, 2
  %v151 = vrot.slane %v108, 2
  %v152 = vsel %vm149, %v150, %v151
  %v153 = vrot.slane %v114, 2
  %v154 = vrot.slane %v118, 2
  %v155 = vsel %vm149, %v153, %v154
  %156 = vrot.lane.b32.xlu0 %v152, 96
  %v157 = vpop.permute.xlu0 %156
  %158 = vrot.lane.b32.xlu0 %v151, 96
  %v159 = vpop.permute.xlu0 %158
  %160 = vrot.lane.b32.xlu0 %v155, 96
  %v161 = vpop.permute.xlu0 %160
  %162 = vrot.lane.b32.xlu0 %v154, 96
  %v163 = vpop.permute.xlu0 %162
  %v168 = vadd.f32 %v145, %v157
  %v169 = vadd.f32 %v146, %v159
  %v170 = vadd.f32 %v147, %v161
  %v171 = vadd.f32 %v148, %v163
  %v172 = vld [vmem:[%s2] sm:$0x1]
  %v174 = vlaneseq
  %v175 = vshrl.u32 %v174, 7
  %v176 = vsub.s32 0, %v175
  %v177 = vrot.slane %v172, %v176
  %v179 = vadd.f32 %v168, %v177
  %v180 = vadd.f32 %v169, %v177
  %v181 = vadd.f32 %v170, %v177
  %v182 = vadd.f32 %v171, %v177
  %v183 = vmax.f32 %v179, 0.0
  %v184 = vmax.f32 %v180, 0.0
  %v185 = vmax.f32 %v181, 0.0
  %v186 = vmax.f32 %v182, 0.0
  %vm187 = vcmask 130048
  %v188 = vsel %vm187, %v183, -inf
  %vm189 = vcmask 128000
  %v190 = vsel %vm189, %v184, -inf
  %v191 = vmax.f32 %v188, %v190
  %v192 = vrot.slane %v191, 4
  %v193 = vmax.f32 %v191, %v192
  %v194 = vrot.slane %v193, 2
  %v195 = vmax.f32 %v193, %v194
  %v196 = vrot.slane %v195, 1
  %v197 = vmax.f32 %v195, %v196
  %v198 = vsel %vm187, %v185, -inf
  %v199 = vsel %vm189, %v186, -inf
  %v200 = vmax.f32 %v198, %v199
  %v201 = vrot.slane %v200, 4
  %v202 = vmax.f32 %v200, %v201
  %v203 = vrot.slane %v202, 2
  %v204 = vmax.f32 %v202, %v203
  %v205 = vrot.slane %v204, 1
  %v206 = vmax.f32 %v204, %v205
  %vm207 = vcmask 1044480
  %v208 = vrot.slane %v104, 3
  %v209 = vrot.slane %v108, 3
  %v210 = vsel %vm207, %v208, %v209
  %v211 = vrot.slane %v114, 3
  %v212 = vrot.slane %v118, 3
  %v213 = vsel %vm207, %v211, %v212
  %214 = vrot.lane.b32.xlu0 %v210, 80
  %v215 = vpop.permute.xlu0 %214
  %216 = vrot.lane.b32.xlu0 %v209, 80
  %v217 = vpop.permute.xlu0 %216
  %218 = vrot.lane.b32.xlu0 %v213, 80
  %v219 = vpop.permute.xlu0 %218
  %220 = vrot.lane.b32.xlu0 %v212, 80
  %v221 = vpop.permute.xlu0 %220
  %v226 = vadd.f32 %v168, %v215
  %v227 = vadd.f32 %v169, %v217
  %v228 = vadd.f32 %v170, %v219
  %v229 = vadd.f32 %v171, %v221
  %230 = vrot.lane.b32.xlu0 %v177, 32
  %v231 = vpop.permute.xlu0 %230
  %v233 = vadd.f32 %v226, %v231
  %v234 = vadd.f32 %v227, %v231
  %v235 = vadd.f32 %v228, %v231
  %v236 = vadd.f32 %v229, %v231
  %v237 = vmax.f32 %v233, 0.0
  %v238 = vmax.f32 %v234, 0.0
  %v239 = vmax.f32 %v235, 0.0
  %v240 = vmax.f32 %v236, 0.0
  %vm241 = vcmask 523648
  %v242 = vsel %vm241, %v237, -inf
  %vm243 = vcmask 520576
  %v244 = vsel %vm243, %v238, -inf
  %v245 = vmax.f32 %v242, %v244
  %v246 = vrot.slane %v245, 4
  %v247 = vmax.f32 %v245, %v246
  %v248 = vrot.slane %v247, 2
  %v249 = vmax.f32 %v247, %v248
  %v250 = vrot.slane %v249, 1
  %v251 = vmax.f32 %v249, %v250
  %v252 = vsel %vm241, %v239, -inf
  %v253 = vsel %vm243, %v240, -inf
  %v254 = vmax.f32 %v252, %v253
  %v255 = vrot.slane %v254, 4
  %v256 = vmax.f32 %v254, %v255
  %v257 = vrot.slane %v256, 2
  %v258 = vmax.f32 %v256, %v257
  %v259 = vrot.slane %v258, 1
  %v260 = vmax.f32 %v258, %v259
  %v265 = vrot.slane %v106, 1
  %v266 = vrot.slane %v110, 1
  %v267 = vsel %vm126, %v265, %v266
  %v268 = vrot.slane %v116, 1
  %v269 = vrot.slane %v120, 1
  %v270 = vsel %vm126, %v268, %v269
  %271 = vrot.lane.b32.xlu0 %v267, 112
  %v272 = vpop.permute.xlu0 %271
  %273 = vrot.lane.b32.xlu0 %v266, 112
  %v274 = vpop.permute.xlu0 %273
  %275 = vrot.lane.b32.xlu0 %v270, 112
  %v276 = vpop.permute.xlu0 %275
  %277 = vrot.lane.b32.xlu0 %v269, 112
  %v278 = vpop.permute.xlu0 %277
  %v283 = vadd.f32 %v104, %v272
  %v284 = vadd.f32 %v108, %v274
  %v285 = vadd.f32 %v114, %v276
  %v286 = vadd.f32 %v118, %v278
  %v287 = vrot.slane %v106, 2
  %v288 = vrot.slane %v110, 2
  %v289 = vsel %vm149, %v287, %v288
  %v290 = vrot.slane %v116, 2
  %v291 = vrot.slane %v120, 2
  %v292 = vsel %vm149, %v290, %v291
  %293 = vrot.lane.b32.xlu0 %v289, 96
  %v294 = vpop.permute.xlu0 %293
  %295 = vrot.lane.b32.xlu0 %v288, 96
  %v296 = vpop.permute.xlu0 %295
  %297 = vrot.lane.b32.xlu0 %v292, 96
  %v298 = vpop.permute.xlu0 %297
  %299 = vrot.lane.b32.xlu0 %v291, 96
  %v300 = vpop.permute.xlu0 %299
  %v305 = vadd.f32 %v283, %v294
  %v306 = vadd.f32 %v284, %v296
  %v307 = vadd.f32 %v285, %v298
  %v308 = vadd.f32 %v286, %v300
  %v309 = vrot.slane %v106, 3
  %v310 = vrot.slane %v110, 3
  %v311 = vsel %vm207, %v309, %v310
  %v312 = vrot.slane %v116, 3
  %v313 = vrot.slane %v120, 3
  %v314 = vsel %vm207, %v312, %v313
  %315 = vrot.lane.b32.xlu0 %v311, 80
  %v316 = vpop.permute.xlu0 %315
  %317 = vrot.lane.b32.xlu0 %v310, 80
  %v318 = vpop.permute.xlu0 %317
  %319 = vrot.lane.b32.xlu0 %v314, 80
  %v320 = vpop.permute.xlu0 %319
  %321 = vrot.lane.b32.xlu0 %v313, 80
  %v322 = vpop.permute.xlu0 %321
  %v327 = vadd.f32 %v305, %v316
  %v328 = vadd.f32 %v306, %v318
  %v329 = vadd.f32 %v307, %v320
  %v330 = vadd.f32 %v308, %v322
  %vm331 = vcmask 1043456
  %v332 = vrot.slane %v106, 4
  %v333 = vrot.slane %v110, 4
  %v334 = vsel %vm331, %v332, %v333
  %v335 = vrot.slane %v116, 4
  %v336 = vrot.slane %v120, 4
  %v337 = vsel %vm331, %v335, %v336
  %338 = vrot.lane.b32.xlu0 %v334, 64
  %v339 = vpop.permute.xlu0 %338
  %340 = vrot.lane.b32.xlu0 %v333, 64
  %v341 = vpop.permute.xlu0 %340
  %342 = vrot.lane.b32.xlu0 %v337, 64
  %v343 = vpop.permute.xlu0 %342
  %344 = vrot.lane.b32.xlu0 %v336, 64
  %v345 = vpop.permute.xlu0 %344
  %v350 = vadd.f32 %v327, %v339
  %v351 = vadd.f32 %v328, %v341
  %v352 = vadd.f32 %v329, %v343
  %v353 = vadd.f32 %v330, %v345
  %354 = vrot.lane.b32.xlu0 %v177, 80
  %v355 = vpop.permute.xlu0 %354
  %v357 = vadd.f32 %v350, %v355
  %v358 = vadd.f32 %v351, %v355
  %v359 = vadd.f32 %v352, %v355
  %v360 = vadd.f32 %v353, %v355
  %v361 = vmax.f32 %v357, 0.0
  %v362 = vmax.f32 %v358, 0.0
  %v363 = vmax.f32 %v359, 0.0
  %v364 = vmax.f32 %v360, 0.0
  %vm365 = vcmask 1048448
  %v366 = vsel %vm365, %v361, -inf
  %vm367 = vcmask 1044352
  %v368 = vsel %vm367, %v362, -inf
  %v369 = vmax.f32 %v366, %v368
  %v370 = vrot.slane %v369, 4
  %v371 = vmax.f32 %v369, %v370
  %v372 = vrot.slane %v371, 2
  %v373 = vmax.f32 %v371, %v372
  %v374 = vrot.slane %v373, 1
  %v375 = vmax.f32 %v373, %v374
  %v376 = vsel %vm365, %v363, -inf
  %v377 = vsel %vm367, %v364, -inf
  %v378 = vmax.f32 %v376, %v377
  %v379 = vrot.slane %v378, 4
  %v380 = vmax.f32 %v378, %v379
  %v381 = vrot.slane %v380, 2
  %v382 = vmax.f32 %v380, %v381
  %v383 = vrot.slane %v382, 1
  %v384 = vmax.f32 %v382, %v383
  %v385 = vlaneseq
  %v386 = vand.u32 %v385, 127
  %vm387 = vcmp.lt.s32.totalorder %v386, 8
  %vm388 = vcmp.lt.s32.totalorder %v386, 0
  %v389 = vsub.s32 0, %v386
  %v390 = vsel %vm388, %v389, %v386
  %v391 = vshrl.u32 %v390, 4
  %v392 = vand.u32 %v390, 15
  %v393 = vsub.s32 0, %v392
  %v394 = vsel %vm388, %v393, %v392
  %vm395 = vcmp.ne.s32.totalorder %v394, 0
  %vm396 = vcmp.lt.s32.totalorder %v394, 0
  %vm397 = vmand %vm396, %vm395
  %v398 = vadd.s32 %v394, 16
  %v399 = vsel %vm397, %v398, %v394
  %vm400 = vcmp.lt.s32.totalorder %v399, 8
  %v401 = vld [vmem:[%s3] sm:$0xf]
  %v402 = vld [vmem:[%s3 + $0x4] sm:$0xf]
  %v403 = vld [vmem:[%s3 + $0x8] sm:$0xf]
  %v404 = vld [vmem:[%s3 + $0xc] sm:$0xf]
  %v405 = vld [vmem:[%s4] sm:$0xff]
  %v406 = vld [vmem:[%s4 + $0x8] sm:$0xff]
  %v407 = vld [vmem:[%s5] sm:$0x1]
  %v409 = vlaneseq
  %v410 = vshrl.u32 %v409, 7
  %v411 = vsub.s32 0, %v410
  %v412 = vrot.slane %v407, %v411
  %v418 = vunpack.c.l.b16 %v401
  %v419 = vunpack.c.l.b16 %v402
  %v420 = vunpack.c.l.b16 %v403
  %v421 = vunpack.c.l.b16 %v404
  %v422 = vpack.c.b16 %v419, %v418
  %v423 = vpack.c.b16 %v421, %v420
  %426 = vmatprep.subr.bf16.mxu0 0
  %427 = vmatpush1.bf16.msra.mxu0 %v422
  %428 = vmatprep.subr.bf16.mxu0 0
  %429 = vmatpush1.bf16.msra.mxu0 %v423
  %430 = vmatprep.subr.bf16.mxu0 0
  %431 = vmatpush1.bf16.msra.mxu0 0
  %432 = vmatprep.subr.bf16.mxu0 0
  %433 = vmatpush1.bf16.msra.mxu0 0
  %434 = vmatprep.subr.bf16.mxu0 0
  %435 = vmatpush1.bf16.msra.mxu0 0
  %436 = vmatprep.subr.bf16.mxu0 0
  %437 = vmatpush1.bf16.msra.mxu0 0
  %438 = vmatprep.subr.bf16.mxu0 0
  %439 = vmatpush1.bf16.msra.mxu0 0
  %440 = vmatprep.subr.bf16.mxu0 0
  %441 = vmatpush1.bf16.msra.mxu0 0
  %442 = vmatprep.subr.bf16.mxu0 0
  %443 = vmatpush1.bf16.msra.mxu0 0
  %444 = vmatprep.subr.bf16.mxu0 0
  %445 = vmatpush1.bf16.msra.mxu0 0
  %446 = vmatprep.subr.bf16.mxu0 0
  %447 = vmatpush1.bf16.msra.mxu0 0
  %448 = vmatprep.subr.bf16.mxu0 0
  %449 = vmatpush1.bf16.msra.mxu0 0
  %450 = vmatprep.subr.bf16.mxu0 0
  %451 = vmatpush1.bf16.msra.mxu0 0
  %452 = vmatprep.subr.bf16.mxu0 0
  %453 = vmatpush1.bf16.msra.mxu0 0
  %454 = vmatprep.subr.bf16.mxu0 0
  %455 = vmatpush1.bf16.msra.mxu0 0
  %456 = vmatprep.subr.bf16.mxu0 0
  %457 = vmatpush1.bf16.msra.mxu0 0
  %458 = vmatprep.mubr.bf16.mxu0 0
  %459 = vmatmul.mubr.bf16.gmra.mrb[0].mxu0 %v64
  %v460 = vpop.f32.mrb[0].mxu0
  %v461 = vadd.f32 %v412, %v460
  %v462 = vpop.f32.mrb[0].mxu0
  %v463 = vpop.f32.mrb[0].mxu0
  %v464 = vadd.f32 %v412, %v463
  %v465 = vpop.f32.mrb[0].mxu0
  %466 = vmatprep.mubr.bf16.mxu0 0
  %467 = vmatmul.mubr.bf16.gmra.mrb[0].mxu0 %v67
  %v468 = vpop.f32.mrb[0].mxu0
  %v469 = vadd.f32 %v412, %v468
  %v470 = vpop.f32.mrb[0].mxu0
  %v471 = vpop.f32.mrb[0].mxu0
  %v472 = vadd.f32 %v412, %v471
  %v473 = vpop.f32.mrb[0].mxu0
  %474 = vdwg.mxu0
  %v476 = vrot.slane %v472, 6
  %v478 = vsel %vm400, %v461, %v476
  %v480 = vsel %vm187, 0.0, 0
  %482 = vmatprep.subr.mxu0 0.0
  %483 = vmatpush1.msra.mxu0 %v405
  %484 = vmatprep.subr.mxu0 0.0
  %485 = vmatpush1.msra.mxu0 %v406
  %486 = vmatprep.subr.mxu0 0.0
  %487 = vmatpush1.msra.mxu0 0.0
  %488 = vmatprep.subr.mxu0 0.0
  %489 = vmatpush1.msra.mxu0 0.0
  %490 = vmatprep.subr.mxu0 0.0
  %491 = vmatpush1.msra.mxu0 0.0
  %492 = vmatprep.subr.mxu0 0.0
  %493 = vmatpush1.msra.mxu0 0.0
  %494 = vmatprep.subr.mxu0 0.0
  %495 = vmatpush1.msra.mxu0 0.0
  %496 = vmatprep.subr.mxu0 0.0
  %497 = vmatpush1.msra.mxu0 0.0
  %498 = vmatprep.subr.mxu0 0.0
  %499 = vmatpush1.msra.mxu0 0.0
  %500 = vmatprep.subr.mxu0 0.0
  %501 = vmatpush1.msra.mxu0 0.0
  %502 = vmatprep.subr.mxu0 0.0
  %503 = vmatpush1.msra.mxu0 0.0
  %504 = vmatprep.subr.mxu0 0.0
  %505 = vmatpush1.msra.mxu0 0.0
  %506 = vmatprep.subr.mxu0 0.0
  %507 = vmatpush1.msra.mxu0 0.0
  %508 = vmatprep.subr.mxu0 0.0
  %509 = vmatpush1.msra.mxu0 0.0
  %510 = vmatprep.subr.mxu0 0.0
  %511 = vmatpush1.msra.mxu0 0.0
  %512 = vmatprep.subr.mxu0 0.0
  %513 = vmatpush1.msra.mxu0 0.0
  %514 = vmatprep.subr.mxu0 0.0
  %515 = vmatpush1.msra.mxu0 0.0
  %516 = vmatprep.subr.mxu0 0.0
  %517 = vmatpush1.msra.mxu0 0.0
  %518 = vmatprep.subr.mxu0 0.0
  %519 = vmatpush1.msra.mxu0 0.0
  %520 = vmatprep.subr.mxu0 0.0
  %521 = vmatpush1.msra.mxu0 0.0
  %522 = vmatprep.subr.mxu0 0.0
  %523 = vmatpush1.msra.mxu0 0.0
  %524 = vmatprep.subr.mxu0 0.0
  %525 = vmatpush1.msra.mxu0 0.0
  %526 = vmatprep.subr.mxu0 0.0
  %527 = vmatpush1.msra.mxu0 0.0
  %528 = vmatprep.subr.mxu0 0.0
  %529 = vmatpush1.msra.mxu0 0.0
  %530 = vmatprep.subr.mxu0 0.0
  %531 = vmatpush1.msra.mxu0 0.0
  %532 = vmatprep.subr.mxu0 0.0
  %533 = vmatpush1.msra.mxu0 0.0
  %534 = vmatprep.subr.mxu0 0.0
  %535 = vmatpush1.msra.mxu0 0.0
  %536 = vmatprep.subr.mxu0 0.0
  %537 = vmatpush1.msra.mxu0 0.0
  %538 = vmatprep.subr.mxu0 0.0
  %539 = vmatpush1.msra.mxu0 0.0
  %540 = vmatprep.subr.mxu0 0.0
  %541 = vmatpush1.msra.mxu0 0.0
  %542 = vmatprep.subr.mxu0 0.0
  %543 = vmatpush1.msra.mxu0 0.0
  %544 = vmatprep.subr.mxu0 0.0
  %545 = vmatpush1.msra.mxu0 0.0
  %546 = vmatprep.mubr.f32.mxu0 0.0
  %547 = vmatmul.mubr.f32.gmra.mrb[0].mxu0 %v480
  %v548 = vpop.f32.mrb[0].mxu0
  %v549 = vadd.f32 0.0, %v548
  %v550 = vpop.f32.mrb[0].mxu0
  %551 = vdwg.mxu0
  %v552 = vadd.f32 %v478, %v549
  %v553 = vxor.u32 %v552, 2147483648
  %v554 = vmul.f32 %v553, 1.442695
  %v555 = vpow.pop %v554
  %v556 = vadd.f32 %v555, 1.0
  %v557 = vrcp.pop %v556
  %v558 = vmul.f32 1.0, %v557
  %v559 = vtanh.pop %v552
  %v560 = vmul.f32 %v558, 0.0
  %562 = vrot.lane.b32.xlu0 %v559, 80
  %v563 = vpop.permute.xlu0 %562
  %v565 = vmul.f32 %v558, %v563
  %567 = vrot.lane.b32.xlu0 %v565, 16
  %v568 = vpop.permute.xlu0 %567
  %v570 = vadd.f32 %v560, %v568
  %v571 = vtanh.pop %v570
  %573 = vrot.lane.b32.xlu0 %v571, 16
  %v574 = vpop.permute.xlu0 %573
  %v576 = vmul.f32 %v558, %v574
  %v577 = vrot.slane %v472, 2
  %v579 = vsel %vm400, %v461, %v577
  %581 = vrot.lane.b32.xlu0 %v576, 96
  %v582 = vpop.permute.xlu0 %581
  %v583 = vsel %vm187, %v582, 0
  %585 = vmatprep.subr.mxu0 0.0
  %586 = vmatpush1.msra.mxu0 %v405
  %587 = vmatprep.subr.mxu0 0.0
  %588 = vmatpush1.msra.mxu0 %v406
  %589 = vmatprep.subr.mxu0 0.0
  %590 = vmatpush1.msra.mxu0 0.0
  %591 = vmatprep.subr.mxu0 0.0
  %592 = vmatpush1.msra.mxu0 0.0
  %593 = vmatprep.subr.mxu0 0.0
  %594 = vmatpush1.msra.mxu0 0.0
  %595 = vmatprep.subr.mxu0 0.0
  %596 = vmatpush1.msra.mxu0 0.0
  %597 = vmatprep.subr.mxu0 0.0
  %598 = vmatpush1.msra.mxu0 0.0
  %599 = vmatprep.subr.mxu0 0.0
  %600 = vmatpush1.msra.mxu0 0.0
  %601 = vmatprep.subr.mxu0 0.0
  %602 = vmatpush1.msra.mxu0 0.0
  %603 = vmatprep.subr.mxu0 0.0
  %604 = vmatpush1.msra.mxu0 0.0
  %605 = vmatprep.subr.mxu0 0.0
  %606 = vmatpush1.msra.mxu0 0.0
  %607 = vmatprep.subr.mxu0 0.0
  %608 = vmatpush1.msra.mxu0 0.0
  %609 = vmatprep.subr.mxu0 0.0
  %610 = vmatpush1.msra.mxu0 0.0
  %611 = vmatprep.subr.mxu0 0.0
  %612 = vmatpush1.msra.mxu0 0.0
  %613 = vmatprep.subr.mxu0 0.0
  %614 = vmatpush1.msra.mxu0 0.0
  %615 = vmatprep.subr.mxu0 0.0
  %616 = vmatpush1.msra.mxu0 0.0
  %617 = vmatprep.subr.mxu0 0.0
  %618 = vmatpush1.msra.mxu0 0.0
  %619 = vmatprep.subr.mxu0 0.0
  %620 = vmatpush1.msra.mxu0 0.0
  %621 = vmatprep.subr.mxu0 0.0
  %622 = vmatpush1.msra.mxu0 0.0
  %623 = vmatprep.subr.mxu0 0.0
  %624 = vmatpush1.msra.mxu0 0.0
  %625 = vmatprep.subr.mxu0 0.0
  %626 = vmatpush1.msra.mxu0 0.0
  %627 = vmatprep.subr.mxu0 0.0
  %628 = vmatpush1.msra.mxu0 0.0
  %629 = vmatprep.subr.mxu0 0.0
  %630 = vmatpush1.msra.mxu0 0.0
  %631 = vmatprep.subr.mxu0 0.0
  %632 = vmatpush1.msra.mxu0 0.0
  %633 = vmatprep.subr.mxu0 0.0
  %634 = vmatpush1.msra.mxu0 0.0
  %635 = vmatprep.subr.mxu0 0.0
  %636 = vmatpush1.msra.mxu0 0.0
  %637 = vmatprep.subr.mxu0 0.0
  %638 = vmatpush1.msra.mxu0 0.0
  %639 = vmatprep.subr.mxu0 0.0
  %640 = vmatpush1.msra.mxu0 0.0
  %641 = vmatprep.subr.mxu0 0.0
  %642 = vmatpush1.msra.mxu0 0.0
  %643 = vmatprep.subr.mxu0 0.0
  %644 = vmatpush1.msra.mxu0 0.0
  %645 = vmatprep.subr.mxu0 0.0
  %646 = vmatpush1.msra.mxu0 0.0
  %647 = vmatprep.subr.mxu0 0.0
  %648 = vmatpush1.msra.mxu0 0.0
  %649 = vmatprep.mubr.f32.mxu0 0.0
  %650 = vmatmul.mubr.f32.gmra.mrb[0].mxu0 %v583
  %v651 = vpop.f32.mrb[0].mxu0
  %v652 = vadd.f32 0.0, %v651
  %v653 = vpop.f32.mrb[0].mxu0
  %654 = vdwg.mxu0
  %v656 = vrot.slane %v652, 6
  %v658 = vadd.f32 %v579, %v656
  %v659 = vxor.u32 %v658, 2147483648
  %v660 = vmul.f32 %v659, 1.442695
  %v661 = vpow.pop %v660
  %v662 = vadd.f32 %v661, 1.0
  %v663 = vrcp.pop %v662
  %v664 = vmul.f32 1.0, %v663
  %v665 = vtanh.pop %v658
  %v667 = vrot.slane %v570, 6
  %v669 = vmul.f32 %v664, %v667
  %671 = vrot.lane.b32.xlu0 %v665, 80
  %v672 = vpop.permute.xlu0 %671
  %v674 = vmul.f32 %v664, %v672
  %676 = vrot.lane.b32.xlu0 %v674, 16
  %v677 = vpop.permute.xlu0 %676
  %v679 = vadd.f32 %v669, %v677
  %v680 = vtanh.pop %v679
  %682 = vrot.lane.b32.xlu0 %v680, 16
  %v683 = vpop.permute.xlu0 %682
  %v685 = vmul.f32 %v664, %v683
  %v687 = vrot.slane %v685, 2
  %688 = vrot.lane.b32.xlu0 %v687, 96
  %v689 = vpop.permute.xlu0 %688
  %v690 = vsel %vm187, %v689, 0
  %692 = vmatprep.subr.mxu0 0.0
  %693 = vmatpush1.msra.mxu0 %v405
  %694 = vmatprep.subr.mxu0 0.0
  %695 = vmatpush1.msra.mxu0 %v406
  %696 = vmatprep.subr.mxu0 0.0
  %697 = vmatpush1.msra.mxu0 0.0
  %698 = vmatprep.subr.mxu0 0.0
  %699 = vmatpush1.msra.mxu0 0.0
  %700 = vmatprep.subr.mxu0 0.0
  %701 = vmatpush1.msra.mxu0 0.0
  %702 = vmatprep.subr.mxu0 0.0
  %703 = vmatpush1.msra.mxu0 0.0
  %704 = vmatprep.subr.mxu0 0.0
  %705 = vmatpush1.msra.mxu0 0.0
  %706 = vmatprep.subr.mxu0 0.0
  %707 = vmatpush1.msra.mxu0 0.0
  %708 = vmatprep.subr.mxu0 0.0
  %709 = vmatpush1.msra.mxu0 0.0
  %710 = vmatprep.subr.mxu0 0.0
  %711 = vmatpush1.msra.mxu0 0.0
  %712 = vmatprep.subr.mxu0 0.0
  %713 = vmatpush1.msra.mxu0 0.0
  %714 = vmatprep.subr.mxu0 0.0
  %715 = vmatpush1.msra.mxu0 0.0
  %716 = vmatprep.subr.mxu0 0.0
  %717 = vmatpush1.msra.mxu0 0.0
  %718 = vmatprep.subr.mxu0 0.0
  %719 = vmatpush1.msra.mxu0 0.0
  %720 = vmatprep.subr.mxu0 0.0
  %721 = vmatpush1.msra.mxu0 0.0
  %722 = vmatprep.subr.mxu0 0.0
  %723 = vmatpush1.msra.mxu0 0.0
  %724 = vmatprep.subr.mxu0 0.0
  %725 = vmatpush1.msra.mxu0 0.0
  %726 = vmatprep.subr.mxu0 0.0
  %727 = vmatpush1.msra.mxu0 0.0
  %728 = vmatprep.subr.mxu0 0.0
  %729 = vmatpush1.msra.mxu0 0.0
  %730 = vmatprep.subr.mxu0 0.0
  %731 = vmatpush1.msra.mxu0 0.0
  %732 = vmatprep.subr.mxu0 0.0
  %733 = vmatpush1.msra.mxu0 0.0
  %734 = vmatprep.subr.mxu0 0.0
  %735 = vmatpush1.msra.mxu0 0.0
  %736 = vmatprep.subr.mxu0 0.0
  %737 = vmatpush1.msra.mxu0 0.0
  %738 = vmatprep.subr.mxu0 0.0
  %739 = vmatpush1.msra.mxu0 0.0
  %740 = vmatprep.subr.mxu0 0.0
  %741 = vmatpush1.msra.mxu0 0.0
  %742 = vmatprep.subr.mxu0 0.0
  %743 = vmatpush1.msra.mxu0 0.0
  %744 = vmatprep.subr.mxu0 0.0
  %745 = vmatpush1.msra.mxu0 0.0
  %746 = vmatprep.subr.mxu0 0.0
  %747 = vmatpush1.msra.mxu0 0.0
  %748 = vmatprep.subr.mxu0 0.0
  %749 = vmatpush1.msra.mxu0 0.0
  %750 = vmatprep.subr.mxu0 0.0
  %751 = vmatpush1.msra.mxu0 0.0
  %752 = vmatprep.subr.mxu0 0.0
  %753 = vmatpush1.msra.mxu0 0.0
  %754 = vmatprep.subr.mxu0 0.0
  %755 = vmatpush1.msra.mxu0 0.0
  %756 = vmatprep.mubr.f32.mxu0 0.0
  %757 = vmatmul.mubr.f32.gmra.mrb[0].mxu0 %v690
  %v758 = vpop.f32.mrb[0].mxu0
  %v759 = vadd.f32 0.0, %v758
  %v760 = vpop.f32.mrb[0].mxu0
  %761 = vdwg.mxu0
  %v763 = vrot.slane %v759, 4
  %v765 = vadd.f32 %v478, %v763
  %v766 = vxor.u32 %v765, 2147483648
  %v767 = vmul.f32 %v766, 1.442695
  %v768 = vpow.pop %v767
  %v769 = vadd.f32 %v768, 1.0
  %v770 = vrcp.pop %v769
  %v771 = vmul.f32 1.0, %v770
  %v772 = vtanh.pop %v765
  %v774 = vrot.slane %v679, 6
  %v776 = vmul.f32 %v771, %v774
  %778 = vrot.lane.b32.xlu0 %v772, 80
  %v779 = vpop.permute.xlu0 %778
  %v781 = vmul.f32 %v771, %v779
  %783 = vrot.lane.b32.xlu0 %v781, 16
  %v784 = vpop.permute.xlu0 %783
  %v786 = vadd.f32 %v776, %v784
  %v787 = vtanh.pop %v786
  %789 = vrot.lane.b32.xlu0 %v787, 16
  %v790 = vpop.permute.xlu0 %789
  %v792 = vmul.f32 %v771, %v790
  %v794 = vrot.slane %v792, 4
  %795 = vrot.lane.b32.xlu0 %v794, 96
  %v796 = vpop.permute.xlu0 %795
  %v797 = vsel %vm187, %v796, 0
  %799 = vmatprep.subr.mxu0 0.0
  %800 = vmatpush1.msra.mxu0 %v405
  %801 = vmatprep.subr.mxu0 0.0
  %802 = vmatpush1.msra.mxu0 %v406
  %803 = vmatprep.subr.mxu0 0.0
  %804 = vmatpush1.msra.mxu0 0.0
  %805 = vmatprep.subr.mxu0 0.0
  %806 = vmatpush1.msra.mxu0 0.0
  %807 = vmatprep.subr.mxu0 0.0
  %808 = vmatpush1.msra.mxu0 0.0
  %809 = vmatprep.subr.mxu0 0.0
  %810 = vmatpush1.msra.mxu0 0.0
  %811 = vmatprep.subr.mxu0 0.0
  %812 = vmatpush1.msra.mxu0 0.0
  %813 = vmatprep.subr.mxu0 0.0
  %814 = vmatpush1.msra.mxu0 0.0
  %815 = vmatprep.subr.mxu0 0.0
  %816 = vmatpush1.msra.mxu0 0.0
  %817 = vmatprep.subr.mxu0 0.0
  %818 = vmatpush1.msra.mxu0 0.0
  %819 = vmatprep.subr.mxu0 0.0
  %820 = vmatpush1.msra.mxu0 0.0
  %821 = vmatprep.subr.mxu0 0.0
  %822 = vmatpush1.msra.mxu0 0.0
  %823 = vmatprep.subr.mxu0 0.0
  %824 = vmatpush1.msra.mxu0 0.0
  %825 = vmatprep.subr.mxu0 0.0
  %826 = vmatpush1.msra.mxu0 0.0
  %827 = vmatprep.subr.mxu0 0.0
  %828 = vmatpush1.msra.mxu0 0.0
  %829 = vmatprep.subr.mxu0 0.0
  %830 = vmatpush1.msra.mxu0 0.0
  %831 = vmatprep.subr.mxu0 0.0
  %832 = vmatpush1.msra.mxu0 0.0
  %833 = vmatprep.subr.mxu0 0.0
  %834 = vmatpush1.msra.mxu0 0.0
  %835 = vmatprep.subr.mxu0 0.0
  %836 = vmatpush1.msra.mxu0 0.0
  %837 = vmatprep.subr.mxu0 0.0
  %838 = vmatpush1.msra.mxu0 0.0
  %839 = vmatprep.subr.mxu0 0.0
  %840 = vmatpush1.msra.mxu0 0.0
  %841 = vmatprep.subr.mxu0 0.0
  %842 = vmatpush1.msra.mxu0 0.0
  %843 = vmatprep.subr.mxu0 0.0
  %844 = vmatpush1.msra.mxu0 0.0
  %845 = vmatprep.subr.mxu0 0.0
  %846 = vmatpush1.msra.mxu0 0.0
  %847 = vmatprep.subr.mxu0 0.0
  %848 = vmatpush1.msra.mxu0 0.0
  %849 = vmatprep.subr.mxu0 0.0
  %850 = vmatpush1.msra.mxu0 0.0
  %851 = vmatprep.subr.mxu0 0.0
  %852 = vmatpush1.msra.mxu0 0.0
  %853 = vmatprep.subr.mxu0 0.0
  %854 = vmatpush1.msra.mxu0 0.0
  %855 = vmatprep.subr.mxu0 0.0
  %856 = vmatpush1.msra.mxu0 0.0
  %857 = vmatprep.subr.mxu0 0.0
  %858 = vmatpush1.msra.mxu0 0.0
  %859 = vmatprep.subr.mxu0 0.0
  %860 = vmatpush1.msra.mxu0 0.0
  %861 = vmatprep.subr.mxu0 0.0
  %862 = vmatpush1.msra.mxu0 0.0
  %863 = vmatprep.mubr.f32.mxu0 0.0
  %864 = vmatmul.mubr.f32.gmra.mrb[0].mxu0 %v797
  %v865 = vpop.f32.mrb[0].mxu0
  %v866 = vadd.f32 0.0, %v865
  %v867 = vpop.f32.mrb[0].mxu0
  %868 = vdwg.mxu0
  %v870 = vrot.slane %v866, 2
  %v872 = vadd.f32 %v579, %v870
  %v873 = vxor.u32 %v872, 2147483648
  %v874 = vmul.f32 %v873, 1.442695
  %v875 = vpow.pop %v874
  %v876 = vadd.f32 %v875, 1.0
  %v877 = vrcp.pop %v876
  %v878 = vmul.f32 1.0, %v877
  %v879 = vtanh.pop %v872
  %v881 = vrot.slane %v786, 6
  %v883 = vmul.f32 %v878, %v881
  %885 = vrot.lane.b32.xlu0 %v879, 80
  %v886 = vpop.permute.xlu0 %885
  %v888 = vmul.f32 %v878, %v886
  %890 = vrot.lane.b32.xlu0 %v888, 16
  %v891 = vpop.permute.xlu0 %890
  %v893 = vadd.f32 %v883, %v891
  %v894 = vtanh.pop %v893
  %896 = vrot.lane.b32.xlu0 %v894, 16
  %v897 = vpop.permute.xlu0 %896
  %v899 = vmul.f32 %v878, %v897
  %v901 = vrot.slane %v469, 6
  %v903 = vsel %vm400, %v464, %v901
  %v905 = vrot.slane %v899, 6
  %906 = vrot.lane.b32.xlu0 %v905, 96
  %v907 = vpop.permute.xlu0 %906
  %v908 = vsel %vm187, %v907, 0
  %910 = vmatprep.subr.mxu0 0.0
  %911 = vmatpush1.msra.mxu0 %v405
  %912 = vmatprep.subr.mxu0 0.0
  %913 = vmatpush1.msra.mxu0 %v406
  %914 = vmatprep.subr.mxu0 0.0
  %915 = vmatpush1.msra.mxu0 0.0
  %916 = vmatprep.subr.mxu0 0.0
  %917 = vmatpush1.msra.mxu0 0.0
  %918 = vmatprep.subr.mxu0 0.0
  %919 = vmatpush1.msra.mxu0 0.0
  %920 = vmatprep.subr.mxu0 0.0
  %921 = vmatpush1.msra.mxu0 0.0
  %922 = vmatprep.subr.mxu0 0.0
  %923 = vmatpush1.msra.mxu0 0.0
  %924 = vmatprep.subr.mxu0 0.0
  %925 = vmatpush1.msra.mxu0 0.0
  %926 = vmatprep.subr.mxu0 0.0
  %927 = vmatpush1.msra.mxu0 0.0
  %928 = vmatprep.subr.mxu0 0.0
  %929 = vmatpush1.msra.mxu0 0.0
  %930 = vmatprep.subr.mxu0 0.0
  %931 = vmatpush1.msra.mxu0 0.0
  %932 = vmatprep.subr.mxu0 0.0
  %933 = vmatpush1.msra.mxu0 0.0
  %934 = vmatprep.subr.mxu0 0.0
  %935 = vmatpush1.msra.mxu0 0.0
  %936 = vmatprep.subr.mxu0 0.0
  %937 = vmatpush1.msra.mxu0 0.0
  %938 = vmatprep.subr.mxu0 0.0
  %939 = vmatpush1.msra.mxu0 0.0
  %940 = vmatprep.subr.mxu0 0.0
  %941 = vmatpush1.msra.mxu0 0.0
  %942 = vmatprep.subr.mxu0 0.0
  %943 = vmatpush1.msra.mxu0 0.0
  %944 = vmatprep.subr.mxu0 0.0
  %945 = vmatpush1.msra.mxu0 0.0
  %946 = vmatprep.subr.mxu0 0.0
  %947 = vmatpush1.msra.mxu0 0.0
  %948 = vmatprep.subr.mxu0 0.0
  %949 = vmatpush1.msra.mxu0 0.0
  %950 = vmatprep.subr.mxu0 0.0
  %951 = vmatpush1.msra.mxu0 0.0
  %952 = vmatprep.subr.mxu0 0.0
  %953 = vmatpush1.msra.mxu0 0.0
  %954 = vmatprep.subr.mxu0 0.0
  %955 = vmatpush1.msra.mxu0 0.0
  %956 = vmatprep.subr.mxu0 0.0
  %957 = vmatpush1.msra.mxu0 0.0
  %958 = vmatprep.subr.mxu0 0.0
  %959 = vmatpush1.msra.mxu0 0.0
  %960 = vmatprep.subr.mxu0 0.0
  %961 = vmatpush1.msra.mxu0 0.0
  %962 = vmatprep.subr.mxu0 0.0
  %963 = vmatpush1.msra.mxu0 0.0
  %964 = vmatprep.subr.mxu0 0.0
  %965 = vmatpush1.msra.mxu0 0.0
  %966 = vmatprep.subr.mxu0 0.0
  %967 = vmatpush1.msra.mxu0 0.0
  %968 = vmatprep.subr.mxu0 0.0
  %969 = vmatpush1.msra.mxu0 0.0
  %970 = vmatprep.subr.mxu0 0.0
  %971 = vmatpush1.msra.mxu0 0.0
  %972 = vmatprep.subr.mxu0 0.0
  %973 = vmatpush1.msra.mxu0 0.0
  %974 = vmatprep.mubr.f32.mxu0 0.0
  %975 = vmatmul.mubr.f32.gmra.mrb[0].mxu0 %v908
  %v976 = vpop.f32.mrb[0].mxu0
  %v977 = vadd.f32 0.0, %v976
  %v978 = vpop.f32.mrb[0].mxu0
  %979 = vdwg.mxu0
  %v980 = vadd.f32 %v903, %v977
  %v981 = vxor.u32 %v980, 2147483648
  %v982 = vmul.f32 %v981, 1.442695
  %v983 = vpow.pop %v982
  %v984 = vadd.f32 %v983, 1.0
  %v985 = vrcp.pop %v984
  %v986 = vmul.f32 1.0, %v985
  %v987 = vtanh.pop %v980
  %v989 = vrot.slane %v893, 6
  %v991 = vmul.f32 %v986, %v989
  %993 = vrot.lane.b32.xlu0 %v987, 80
  %v994 = vpop.permute.xlu0 %993
  %v996 = vmul.f32 %v986, %v994
  %998 = vrot.lane.b32.xlu0 %v996, 16
  %v999 = vpop.permute.xlu0 %998
  %v1001 = vadd.f32 %v991, %v999
  %v1002 = vtanh.pop %v1001
  %1004 = vrot.lane.b32.xlu0 %v1002, 16
  %v1005 = vpop.permute.xlu0 %1004
  %v1007 = vmul.f32 %v986, %v1005
  %v1008 = vrot.slane %v469, 2
  %v1010 = vsel %vm400, %v464, %v1008
  %1012 = vrot.lane.b32.xlu0 %v1007, 96
  %v1013 = vpop.permute.xlu0 %1012
  %v1014 = vsel %vm187, %v1013, 0
  %1016 = vmatprep.subr.mxu0 0.0
  %1017 = vmatpush1.msra.mxu0 %v405
  %1018 = vmatprep.subr.mxu0 0.0
  %1019 = vmatpush1.msra.mxu0 %v406
  %1020 = vmatprep.subr.mxu0 0.0
  %1021 = vmatpush1.msra.mxu0 0.0
  %1022 = vmatprep.subr.mxu0 0.0
  %1023 = vmatpush1.msra.mxu0 0.0
  %1024 = vmatprep.subr.mxu0 0.0
  %1025 = vmatpush1.msra.mxu0 0.0
  %1026 = vmatprep.subr.mxu0 0.0
  %1027 = vmatpush1.msra.mxu0 0.0
  %1028 = vmatprep.subr.mxu0 0.0
  %1029 = vmatpush1.msra.mxu0 0.0
  %1030 = vmatprep.subr.mxu0 0.0
  %1031 = vmatpush1.msra.mxu0 0.0
  %1032 = vmatprep.subr.mxu0 0.0
  %1033 = vmatpush1.msra.mxu0 0.0
  %1034 = vmatprep.subr.mxu0 0.0
  %1035 = vmatpush1.msra.mxu0 0.0
  %1036 = vmatprep.subr.mxu0 0.0
  %1037 = vmatpush1.msra.mxu0 0.0
  %1038 = vmatprep.subr.mxu0 0.0
  %1039 = vmatpush1.msra.mxu0 0.0
  %1040 = vmatprep.subr.mxu0 0.0
  %1041 = vmatpush1.msra.mxu0 0.0
  %1042 = vmatprep.subr.mxu0 0.0
  %1043 = vmatpush1.msra.mxu0 0.0
  %1044 = vmatprep.subr.mxu0 0.0
  %1045 = vmatpush1.msra.mxu0 0.0
  %1046 = vmatprep.subr.mxu0 0.0
  %1047 = vmatpush1.msra.mxu0 0.0
  %1048 = vmatprep.subr.mxu0 0.0
  %1049 = vmatpush1.msra.mxu0 0.0
  %1050 = vmatprep.subr.mxu0 0.0
  %1051 = vmatpush1.msra.mxu0 0.0
  %1052 = vmatprep.subr.mxu0 0.0
  %1053 = vmatpush1.msra.mxu0 0.0
  %1054 = vmatprep.subr.mxu0 0.0
  %1055 = vmatpush1.msra.mxu0 0.0
  %1056 = vmatprep.subr.mxu0 0.0
  %1057 = vmatpush1.msra.mxu0 0.0
  %1058 = vmatprep.subr.mxu0 0.0
  %1059 = vmatpush1.msra.mxu0 0.0
  %1060 = vmatprep.subr.mxu0 0.0
  %1061 = vmatpush1.msra.mxu0 0.0
  %1062 = vmatprep.subr.mxu0 0.0
  %1063 = vmatpush1.msra.mxu0 0.0
  %1064 = vmatprep.subr.mxu0 0.0
  %1065 = vmatpush1.msra.mxu0 0.0
  %1066 = vmatprep.subr.mxu0 0.0
  %1067 = vmatpush1.msra.mxu0 0.0
  %1068 = vmatprep.subr.mxu0 0.0
  %1069 = vmatpush1.msra.mxu0 0.0
  %1070 = vmatprep.subr.mxu0 0.0
  %1071 = vmatpush1.msra.mxu0 0.0
  %1072 = vmatprep.subr.mxu0 0.0
  %1073 = vmatpush1.msra.mxu0 0.0
  %1074 = vmatprep.subr.mxu0 0.0
  %1075 = vmatpush1.msra.mxu0 0.0
  %1076 = vmatprep.subr.mxu0 0.0
  %1077 = vmatpush1.msra.mxu0 0.0
  %1078 = vmatprep.subr.mxu0 0.0
  %1079 = vmatpush1.msra.mxu0 0.0
  %1080 = vmatprep.mubr.f32.mxu0 0.0
  %1081 = vmatmul.mubr.f32.gmra.mrb[0].mxu0 %v1014
  %v1082 = vpop.f32.mrb[0].mxu0
  %v1083 = vadd.f32 0.0, %v1082
  %v1084 = vpop.f32.mrb[0].mxu0
  %1085 = vdwg.mxu0
  %v1087 = vrot.slane %v1083, 6
  %v1089 = vadd.f32 %v1010, %v1087
  %v1090 = vxor.u32 %v1089, 2147483648
  %v1091 = vmul.f32 %v1090, 1.442695
  %v1092 = vpow.pop %v1091
  %v1093 = vadd.f32 %v1092, 1.0
  %v1094 = vrcp.pop %v1093
  %v1095 = vmul.f32 1.0, %v1094
  %v1096 = vtanh.pop %v1089
  %v1098 = vrot.slane %v1001, 6
  %v1100 = vmul.f32 %v1095, %v1098
  %1102 = vrot.lane.b32.xlu0 %v1096, 80
  %v1103 = vpop.permute.xlu0 %1102
  %v1105 = vmul.f32 %v1095, %v1103
  %1107 = vrot.lane.b32.xlu0 %v1105, 16
  %v1108 = vpop.permute.xlu0 %1107
  %v1110 = vadd.f32 %v1100, %v1108
  %v1111 = vtanh.pop %v1110
  %1113 = vrot.lane.b32.xlu0 %v1111, 16
  %v1114 = vpop.permute.xlu0 %1113
  %v1116 = vmul.f32 %v1095, %v1114
  %v1118 = vrot.slane %v1116, 2
  %1119 = vrot.lane.b32.xlu0 %v1118, 96
  %v1120 = vpop.permute.xlu0 %1119
  %v1121 = vsel %vm187, %v1120, 0
  %1123 = vmatprep.subr.mxu0 0.0
  %1124 = vmatpush1.msra.mxu0 %v405
  %1125 = vmatprep.subr.mxu0 0.0
  %1126 = vmatpush1.msra.mxu0 %v406
  %1127 = vmatprep.subr.mxu0 0.0
  %1128 = vmatpush1.msra.mxu0 0.0
  %1129 = vmatprep.subr.mxu0 0.0
  %1130 = vmatpush1.msra.mxu0 0.0
  %1131 = vmatprep.subr.mxu0 0.0
  %1132 = vmatpush1.msra.mxu0 0.0
  %1133 = vmatprep.subr.mxu0 0.0
  %1134 = vmatpush1.msra.mxu0 0.0
  %1135 = vmatprep.subr.mxu0 0.0
  %1136 = vmatpush1.msra.mxu0 0.0
  %1137 = vmatprep.subr.mxu0 0.0
  %1138 = vmatpush1.msra.mxu0 0.0
  %1139 = vmatprep.subr.mxu0 0.0
  %1140 = vmatpush1.msra.mxu0 0.0
  %1141 = vmatprep.subr.mxu0 0.0
  %1142 = vmatpush1.msra.mxu0 0.0
  %1143 = vmatprep.subr.mxu0 0.0
  %1144 = vmatpush1.msra.mxu0 0.0
  %1145 = vmatprep.subr.mxu0 0.0
  %1146 = vmatpush1.msra.mxu0 0.0
  %1147 = vmatprep.subr.mxu0 0.0
  %1148 = vmatpush1.msra.mxu0 0.0
  %1149 = vmatprep.subr.mxu0 0.0
  %1150 = vmatpush1.msra.mxu0 0.0
  %1151 = vmatprep.subr.mxu0 0.0
  %1152 = vmatpush1.msra.mxu0 0.0
  %1153 = vmatprep.subr.mxu0 0.0
  %1154 = vmatpush1.msra.mxu0 0.0
  %1155 = vmatprep.subr.mxu0 0.0
  %1156 = vmatpush1.msra.mxu0 0.0
  %1157 = vmatprep.subr.mxu0 0.0
  %1158 = vmatpush1.msra.mxu0 0.0
  %1159 = vmatprep.subr.mxu0 0.0
  %1160 = vmatpush1.msra.mxu0 0.0
  %1161 = vmatprep.subr.mxu0 0.0
  %1162 = vmatpush1.msra.mxu0 0.0
  %1163 = vmatprep.subr.mxu0 0.0
  %1164 = vmatpush1.msra.mxu0 0.0
  %1165 = vmatprep.subr.mxu0 0.0
  %1166 = vmatpush1.msra.mxu0 0.0
  %1167 = vmatprep.subr.mxu0 0.0
  %1168 = vmatpush1.msra.mxu0 0.0
  %1169 = vmatprep.subr.mxu0 0.0
  %1170 = vmatpush1.msra.mxu0 0.0
  %1171 = vmatprep.subr.mxu0 0.0
  %1172 = vmatpush1.msra.mxu0 0.0
  %1173 = vmatprep.subr.mxu0 0.0
  %1174 = vmatpush1.msra.mxu0 0.0
  %1175 = vmatprep.subr.mxu0 0.0
  %1176 = vmatpush1.msra.mxu0 0.0
  %1177 = vmatprep.subr.mxu0 0.0
  %1178 = vmatpush1.msra.mxu0 0.0
  %1179 = vmatprep.subr.mxu0 0.0
  %1180 = vmatpush1.msra.mxu0 0.0
  %1181 = vmatprep.subr.mxu0 0.0
  %1182 = vmatpush1.msra.mxu0 0.0
  %1183 = vmatprep.subr.mxu0 0.0
  %1184 = vmatpush1.msra.mxu0 0.0
  %1185 = vmatprep.subr.mxu0 0.0
  %1186 = vmatpush1.msra.mxu0 0.0
  %1187 = vmatprep.mubr.f32.mxu0 0.0
  %1188 = vmatmul.mubr.f32.gmra.mrb[0].mxu0 %v1121
  %v1189 = vpop.f32.mrb[0].mxu0
  %v1190 = vadd.f32 0.0, %v1189
  %v1191 = vpop.f32.mrb[0].mxu0
  %1192 = vdwg.mxu0
  %v1194 = vrot.slane %v1190, 4
  %v1196 = vadd.f32 %v903, %v1194
  %v1197 = vxor.u32 %v1196, 2147483648
  %v1198 = vmul.f32 %v1197, 1.442695
  %v1199 = vpow.pop %v1198
  %v1200 = vadd.f32 %v1199, 1.0
  %v1201 = vrcp.pop %v1200
  %v1202 = vmul.f32 1.0, %v1201
  %v1203 = vtanh.pop %v1196
  %v1205 = vrot.slane %v1110, 6
  %v1207 = vmul.f32 %v1202, %v1205
  %1209 = vrot.lane.b32.xlu0 %v1203, 80
  %v1210 = vpop.permute.xlu0 %1209
  %v1212 = vmul.f32 %v1202, %v1210
  %1214 = vrot.lane.b32.xlu0 %v1212, 16
  %v1215 = vpop.permute.xlu0 %1214
  %v1217 = vadd.f32 %v1207, %v1215
  %v1218 = vtanh.pop %v1217
  %1220 = vrot.lane.b32.xlu0 %v1218, 16
  %v1221 = vpop.permute.xlu0 %1220
  %v1223 = vmul.f32 %v1202, %v1221
  %v1225 = vrot.slane %v1223, 4
  %1226 = vrot.lane.b32.xlu0 %v1225, 96
  %v1227 = vpop.permute.xlu0 %1226
  %v1228 = vsel %vm187, %v1227, 0
  %1230 = vmatprep.subr.mxu0 0.0
  %1231 = vmatpush1.msra.mxu0 %v405
  %1232 = vmatprep.subr.mxu0 0.0
  %1233 = vmatpush1.msra.mxu0 %v406
  %1234 = vmatprep.subr.mxu0 0.0
  %1235 = vmatpush1.msra.mxu0 0.0
  %1236 = vmatprep.subr.mxu0 0.0
  %1237 = vmatpush1.msra.mxu0 0.0
  %1238 = vmatprep.subr.mxu0 0.0
  %1239 = vmatpush1.msra.mxu0 0.0
  %1240 = vmatprep.subr.mxu0 0.0
  %1241 = vmatpush1.msra.mxu0 0.0
  %1242 = vmatprep.subr.mxu0 0.0
  %1243 = vmatpush1.msra.mxu0 0.0
  %1244 = vmatprep.subr.mxu0 0.0
  %1245 = vmatpush1.msra.mxu0 0.0
  %1246 = vmatprep.subr.mxu0 0.0
  %1247 = vmatpush1.msra.mxu0 0.0
  %1248 = vmatprep.subr.mxu0 0.0
  %1249 = vmatpush1.msra.mxu0 0.0
  %1250 = vmatprep.subr.mxu0 0.0
  %1251 = vmatpush1.msra.mxu0 0.0
  %1252 = vmatprep.subr.mxu0 0.0
  %1253 = vmatpush1.msra.mxu0 0.0
  %1254 = vmatprep.subr.mxu0 0.0
  %1255 = vmatpush1.msra.mxu0 0.0
  %1256 = vmatprep.subr.mxu0 0.0
  %1257 = vmatpush1.msra.mxu0 0.0
  %1258 = vmatprep.subr.mxu0 0.0
  %1259 = vmatpush1.msra.mxu0 0.0
  %1260 = vmatprep.subr.mxu0 0.0
  %1261 = vmatpush1.msra.mxu0 0.0
  %1262 = vmatprep.subr.mxu0 0.0
  %1263 = vmatpush1.msra.mxu0 0.0
  %1264 = vmatprep.subr.mxu0 0.0
  %1265 = vmatpush1.msra.mxu0 0.0
  %1266 = vmatprep.subr.mxu0 0.0
  %1267 = vmatpush1.msra.mxu0 0.0
  %1268 = vmatprep.subr.mxu0 0.0
  %1269 = vmatpush1.msra.mxu0 0.0
  %1270 = vmatprep.subr.mxu0 0.0
  %1271 = vmatpush1.msra.mxu0 0.0
  %1272 = vmatprep.subr.mxu0 0.0
  %1273 = vmatpush1.msra.mxu0 0.0
  %1274 = vmatprep.subr.mxu0 0.0
  %1275 = vmatpush1.msra.mxu0 0.0
  %1276 = vmatprep.subr.mxu0 0.0
  %1277 = vmatpush1.msra.mxu0 0.0
  %1278 = vmatprep.subr.mxu0 0.0
  %1279 = vmatpush1.msra.mxu0 0.0
  %1280 = vmatprep.subr.mxu0 0.0
  %1281 = vmatpush1.msra.mxu0 0.0
  %1282 = vmatprep.subr.mxu0 0.0
  %1283 = vmatpush1.msra.mxu0 0.0
  %1284 = vmatprep.subr.mxu0 0.0
  %1285 = vmatpush1.msra.mxu0 0.0
  %1286 = vmatprep.subr.mxu0 0.0
  %1287 = vmatpush1.msra.mxu0 0.0
  %1288 = vmatprep.subr.mxu0 0.0
  %1289 = vmatpush1.msra.mxu0 0.0
  %1290 = vmatprep.subr.mxu0 0.0
  %1291 = vmatpush1.msra.mxu0 0.0
  %1292 = vmatprep.subr.mxu0 0.0
  %1293 = vmatpush1.msra.mxu0 0.0
  %1294 = vmatprep.mubr.f32.mxu0 0.0
  %1295 = vmatmul.mubr.f32.gmra.mrb[0].mxu0 %v1228
  %v1296 = vpop.f32.mrb[0].mxu0
  %v1297 = vadd.f32 0.0, %v1296
  %v1298 = vpop.f32.mrb[0].mxu0
  %1299 = vdwg.mxu0
  %v1301 = vrot.slane %v1297, 2
  %v1303 = vadd.f32 %v1010, %v1301
  %v1304 = vxor.u32 %v1303, 2147483648
  %v1305 = vmul.f32 %v1304, 1.442695
  %v1306 = vpow.pop %v1305
  %v1307 = vadd.f32 %v1306, 1.0
  %v1308 = vrcp.pop %v1307
  %v1309 = vmul.f32 1.0, %v1308
  %v1310 = vtanh.pop %v1303
  %v1312 = vrot.slane %v1217, 6
  %v1314 = vmul.f32 %v1309, %v1312
  %1316 = vrot.lane.b32.xlu0 %v1310, 80
  %v1317 = vpop.permute.xlu0 %1316
  %v1319 = vmul.f32 %v1309, %v1317
  %1321 = vrot.lane.b32.xlu0 %v1319, 16
  %v1322 = vpop.permute.xlu0 %1321
  %v1324 = vadd.f32 %v1314, %v1322
  %v1325 = vtanh.pop %v1324
  %1327 = vrot.lane.b32.xlu0 %v1325, 16
  %v1328 = vpop.permute.xlu0 %1327
  %v1330 = vmul.f32 %v1309, %v1328
  %v1332 = vrot.slane %v464, 6
  %v1334 = vsel %vm400, %v469, %v1332
  %v1336 = vrot.slane %v1330, 6
  %1337 = vrot.lane.b32.xlu0 %v1336, 96
  %v1338 = vpop.permute.xlu0 %1337
  %v1339 = vsel %vm187, %v1338, 0
  %1341 = vmatprep.subr.mxu0 0.0
  %1342 = vmatpush1.msra.mxu0 %v405
  %1343 = vmatprep.subr.mxu0 0.0
  %1344 = vmatpush1.msra.mxu0 %v406
  %1345 = vmatprep.subr.mxu0 0.0
  %1346 = vmatpush1.msra.mxu0 0.0
  %1347 = vmatprep.subr.mxu0 0.0
  %1348 = vmatpush1.msra.mxu0 0.0
  %1349 = vmatprep.subr.mxu0 0.0
  %1350 = vmatpush1.msra.mxu0 0.0
  %1351 = vmatprep.subr.mxu0 0.0
  %1352 = vmatpush1.msra.mxu0 0.0
  %1353 = vmatprep.subr.mxu0 0.0
  %1354 = vmatpush1.msra.mxu0 0.0
  %1355 = vmatprep.subr.mxu0 0.0
  %1356 = vmatpush1.msra.mxu0 0.0
  %1357 = vmatprep.subr.mxu0 0.0
  %1358 = vmatpush1.msra.mxu0 0.0
  %1359 = vmatprep.subr.mxu0 0.0
  %1360 = vmatpush1.msra.mxu0 0.0
  %1361 = vmatprep.subr.mxu0 0.0
  %1362 = vmatpush1.msra.mxu0 0.0
  %1363 = vmatprep.subr.mxu0 0.0
  %1364 = vmatpush1.msra.mxu0 0.0
  %1365 = vmatprep.subr.mxu0 0.0
  %1366 = vmatpush1.msra.mxu0 0.0
  %1367 = vmatprep.subr.mxu0 0.0
  %1368 = vmatpush1.msra.mxu0 0.0
  %1369 = vmatprep.subr.mxu0 0.0
  %1370 = vmatpush1.msra.mxu0 0.0
  %1371 = vmatprep.subr.mxu0 0.0
  %1372 = vmatpush1.msra.mxu0 0.0
  %1373 = vmatprep.subr.mxu0 0.0
  %1374 = vmatpush1.msra.mxu0 0.0
  %1375 = vmatprep.subr.mxu0 0.0
  %1376 = vmatpush1.msra.mxu0 0.0
  %1377 = vmatprep.subr.mxu0 0.0
  %1378 = vmatpush1.msra.mxu0 0.0
  %1379 = vmatprep.subr.mxu0 0.0
  %1380 = vmatpush1.msra.mxu0 0.0
  %1381 = vmatprep.subr.mxu0 0.0
  %1382 = vmatpush1.msra.mxu0 0.0
  %1383 = vmatprep.subr.mxu0 0.0
  %1384 = vmatpush1.msra.mxu0 0.0
  %1385 = vmatprep.subr.mxu0 0.0
  %1386 = vmatpush1.msra.mxu0 0.0
  %1387 = vmatprep.subr.mxu0 0.0
  %1388 = vmatpush1.msra.mxu0 0.0
  %1389 = vmatprep.subr.mxu0 0.0
  %1390 = vmatpush1.msra.mxu0 0.0
  %1391 = vmatprep.subr.mxu0 0.0
  %1392 = vmatpush1.msra.mxu0 0.0
  %1393 = vmatprep.subr.mxu0 0.0
  %1394 = vmatpush1.msra.mxu0 0.0
  %1395 = vmatprep.subr.mxu0 0.0
  %1396 = vmatpush1.msra.mxu0 0.0
  %1397 = vmatprep.subr.mxu0 0.0
  %1398 = vmatpush1.msra.mxu0 0.0
  %1399 = vmatprep.subr.mxu0 0.0
  %1400 = vmatpush1.msra.mxu0 0.0
  %1401 = vmatprep.subr.mxu0 0.0
  %1402 = vmatpush1.msra.mxu0 0.0
  %1403 = vmatprep.subr.mxu0 0.0
  %1404 = vmatpush1.msra.mxu0 0.0
  %1405 = vmatprep.mubr.f32.mxu0 0.0
  %1406 = vmatmul.mubr.f32.gmra.mrb[0].mxu0 %v1339
  %v1407 = vpop.f32.mrb[0].mxu0
  %v1408 = vadd.f32 0.0, %v1407
  %v1409 = vpop.f32.mrb[0].mxu0
  %1410 = vdwg.mxu0
  %v1411 = vadd.f32 %v1334, %v1408
  %v1412 = vxor.u32 %v1411, 2147483648
  %v1413 = vmul.f32 %v1412, 1.442695
  %v1414 = vpow.pop %v1413
  %v1415 = vadd.f32 %v1414, 1.0
  %v1416 = vrcp.pop %v1415
  %v1417 = vmul.f32 1.0, %v1416
  %v1418 = vtanh.pop %v1411
  %v1420 = vrot.slane %v1324, 6
  %v1422 = vmul.f32 %v1417, %v1420
  %1424 = vrot.lane.b32.xlu0 %v1418, 80
  %v1425 = vpop.permute.xlu0 %1424
  %v1427 = vmul.f32 %v1417, %v1425
  %1429 = vrot.lane.b32.xlu0 %v1427, 16
  %v1430 = vpop.permute.xlu0 %1429
  %v1432 = vadd.f32 %v1422, %v1430
  %v1433 = vtanh.pop %v1432
  %1435 = vrot.lane.b32.xlu0 %v1433, 16
  %v1436 = vpop.permute.xlu0 %1435
  %v1438 = vmul.f32 %v1417, %v1436
  %v1439 = vrot.slane %v464, 2
  %v1441 = vsel %vm400, %v469, %v1439
  %1443 = vrot.lane.b32.xlu0 %v1438, 96
  %v1444 = vpop.permute.xlu0 %1443
  %v1445 = vsel %vm187, %v1444, 0
  %1447 = vmatprep.subr.mxu0 0.0
  %1448 = vmatpush1.msra.mxu0 %v405
  %1449 = vmatprep.subr.mxu0 0.0
  %1450 = vmatpush1.msra.mxu0 %v406
  %1451 = vmatprep.subr.mxu0 0.0
  %1452 = vmatpush1.msra.mxu0 0.0
  %1453 = vmatprep.subr.mxu0 0.0
  %1454 = vmatpush1.msra.mxu0 0.0
  %1455 = vmatprep.subr.mxu0 0.0
  %1456 = vmatpush1.msra.mxu0 0.0
  %1457 = vmatprep.subr.mxu0 0.0
  %1458 = vmatpush1.msra.mxu0 0.0
  %1459 = vmatprep.subr.mxu0 0.0
  %1460 = vmatpush1.msra.mxu0 0.0
  %1461 = vmatprep.subr.mxu0 0.0
  %1462 = vmatpush1.msra.mxu0 0.0
  %1463 = vmatprep.subr.mxu0 0.0
  %1464 = vmatpush1.msra.mxu0 0.0
  %1465 = vmatprep.subr.mxu0 0.0
  %1466 = vmatpush1.msra.mxu0 0.0
  %1467 = vmatprep.subr.mxu0 0.0
  %1468 = vmatpush1.msra.mxu0 0.0
  %1469 = vmatprep.subr.mxu0 0.0
  %1470 = vmatpush1.msra.mxu0 0.0
  %1471 = vmatprep.subr.mxu0 0.0
  %1472 = vmatpush1.msra.mxu0 0.0
  %1473 = vmatprep.subr.mxu0 0.0
  %1474 = vmatpush1.msra.mxu0 0.0
  %1475 = vmatprep.subr.mxu0 0.0
  %1476 = vmatpush1.msra.mxu0 0.0
  %1477 = vmatprep.subr.mxu0 0.0
  %1478 = vmatpush1.msra.mxu0 0.0
  %1479 = vmatprep.subr.mxu0 0.0
  %1480 = vmatpush1.msra.mxu0 0.0
  %1481 = vmatprep.subr.mxu0 0.0
  %1482 = vmatpush1.msra.mxu0 0.0
  %1483 = vmatprep.subr.mxu0 0.0
  %1484 = vmatpush1.msra.mxu0 0.0
  %1485 = vmatprep.subr.mxu0 0.0
  %1486 = vmatpush1.msra.mxu0 0.0
  %1487 = vmatprep.subr.mxu0 0.0
  %1488 = vmatpush1.msra.mxu0 0.0
  %1489 = vmatprep.subr.mxu0 0.0
  %1490 = vmatpush1.msra.mxu0 0.0
  %1491 = vmatprep.subr.mxu0 0.0
  %1492 = vmatpush1.msra.mxu0 0.0
  %1493 = vmatprep.subr.mxu0 0.0
  %1494 = vmatpush1.msra.mxu0 0.0
  %1495 = vmatprep.subr.mxu0 0.0
  %1496 = vmatpush1.msra.mxu0 0.0
  %1497 = vmatprep.subr.mxu0 0.0
  %1498 = vmatpush1.msra.mxu0 0.0
  %1499 = vmatprep.subr.mxu0 0.0
  %1500 = vmatpush1.msra.mxu0 0.0
  %1501 = vmatprep.subr.mxu0 0.0
  %1502 = vmatpush1.msra.mxu0 0.0
  %1503 = vmatprep.subr.mxu0 0.0
  %1504 = vmatpush1.msra.mxu0 0.0
  %1505 = vmatprep.subr.mxu0 0.0
  %1506 = vmatpush1.msra.mxu0 0.0
  %1507 = vmatprep.subr.mxu0 0.0
  %1508 = vmatpush1.msra.mxu0 0.0
  %1509 = vmatprep.subr.mxu0 0.0
  %1510 = vmatpush1.msra.mxu0 0.0
  %1511 = vmatprep.mubr.f32.mxu0 0.0
  %1512 = vmatmul.mubr.f32.gmra.mrb[0].mxu0 %v1445
  %v1513 = vpop.f32.mrb[0].mxu0
  %v1514 = vadd.f32 0.0, %v1513
  %v1515 = vpop.f32.mrb[0].mxu0
  %1516 = vdwg.mxu0
  %v1518 = vrot.slane %v1514, 6
  %v1520 = vadd.f32 %v1441, %v1518
  %v1521 = vxor.u32 %v1520, 2147483648
  %v1522 = vmul.f32 %v1521, 1.442695
  %v1523 = vpow.pop %v1522
  %v1524 = vadd.f32 %v1523, 1.0
  %v1525 = vrcp.pop %v1524
  %v1526 = vmul.f32 1.0, %v1525
  %v1527 = vtanh.pop %v1520
  %v1529 = vrot.slane %v1432, 6
  %v1531 = vmul.f32 %v1526, %v1529
  %1533 = vrot.lane.b32.xlu0 %v1527, 80
  %v1534 = vpop.permute.xlu0 %1533
  %v1536 = vmul.f32 %v1526, %v1534
  %1538 = vrot.lane.b32.xlu0 %v1536, 16
  %v1539 = vpop.permute.xlu0 %1538
  %v1541 = vadd.f32 %v1531, %v1539
  %v1542 = vtanh.pop %v1541
  %1544 = vrot.lane.b32.xlu0 %v1542, 16
  %v1545 = vpop.permute.xlu0 %1544
  %v1547 = vmul.f32 %v1526, %v1545
  %v1549 = vrot.slane %v1547, 2
  %1550 = vrot.lane.b32.xlu0 %v1549, 96
  %v1551 = vpop.permute.xlu0 %1550
  %v1552 = vsel %vm187, %v1551, 0
  %1554 = vmatprep.subr.mxu0 0.0
  %1555 = vmatpush1.msra.mxu0 %v405
  %1556 = vmatprep.subr.mxu0 0.0
  %1557 = vmatpush1.msra.mxu0 %v406
  %1558 = vmatprep.subr.mxu0 0.0
  %1559 = vmatpush1.msra.mxu0 0.0
  %1560 = vmatprep.subr.mxu0 0.0
  %1561 = vmatpush1.msra.mxu0 0.0
  %1562 = vmatprep.subr.mxu0 0.0
  %1563 = vmatpush1.msra.mxu0 0.0
  %1564 = vmatprep.subr.mxu0 0.0
  %1565 = vmatpush1.msra.mxu0 0.0
  %1566 = vmatprep.subr.mxu0 0.0
  %1567 = vmatpush1.msra.mxu0 0.0
  %1568 = vmatprep.subr.mxu0 0.0
  %1569 = vmatpush1.msra.mxu0 0.0
  %1570 = vmatprep.subr.mxu0 0.0
  %1571 = vmatpush1.msra.mxu0 0.0
  %1572 = vmatprep.subr.mxu0 0.0
  %1573 = vmatpush1.msra.mxu0 0.0
  %1574 = vmatprep.subr.mxu0 0.0
  %1575 = vmatpush1.msra.mxu0 0.0
  %1576 = vmatprep.subr.mxu0 0.0
  %1577 = vmatpush1.msra.mxu0 0.0
  %1578 = vmatprep.subr.mxu0 0.0
  %1579 = vmatpush1.msra.mxu0 0.0
  %1580 = vmatprep.subr.mxu0 0.0
  %1581 = vmatpush1.msra.mxu0 0.0
  %1582 = vmatprep.subr.mxu0 0.0
  %1583 = vmatpush1.msra.mxu0 0.0
  %1584 = vmatprep.subr.mxu0 0.0
  %1585 = vmatpush1.msra.mxu0 0.0
  %1586 = vmatprep.subr.mxu0 0.0
  %1587 = vmatpush1.msra.mxu0 0.0
  %1588 = vmatprep.subr.mxu0 0.0
  %1589 = vmatpush1.msra.mxu0 0.0
  %1590 = vmatprep.subr.mxu0 0.0
  %1591 = vmatpush1.msra.mxu0 0.0
  %1592 = vmatprep.subr.mxu0 0.0
  %1593 = vmatpush1.msra.mxu0 0.0
  %1594 = vmatprep.subr.mxu0 0.0
  %1595 = vmatpush1.msra.mxu0 0.0
  %1596 = vmatprep.subr.mxu0 0.0
  %1597 = vmatpush1.msra.mxu0 0.0
  %1598 = vmatprep.subr.mxu0 0.0
  %1599 = vmatpush1.msra.mxu0 0.0
  %1600 = vmatprep.subr.mxu0 0.0
  %1601 = vmatpush1.msra.mxu0 0.0
  %1602 = vmatprep.subr.mxu0 0.0
  %1603 = vmatpush1.msra.mxu0 0.0
  %1604 = vmatprep.subr.mxu0 0.0
  %1605 = vmatpush1.msra.mxu0 0.0
  %1606 = vmatprep.subr.mxu0 0.0
  %1607 = vmatpush1.msra.mxu0 0.0
  %1608 = vmatprep.subr.mxu0 0.0
  %1609 = vmatpush1.msra.mxu0 0.0
  %1610 = vmatprep.subr.mxu0 0.0
  %1611 = vmatpush1.msra.mxu0 0.0
  %1612 = vmatprep.subr.mxu0 0.0
  %1613 = vmatpush1.msra.mxu0 0.0
  %1614 = vmatprep.subr.mxu0 0.0
  %1615 = vmatpush1.msra.mxu0 0.0
  %1616 = vmatprep.subr.mxu0 0.0
  %1617 = vmatpush1.msra.mxu0 0.0
  %1618 = vmatprep.mubr.f32.mxu0 0.0
  %1619 = vmatmul.mubr.f32.gmra.mrb[0].mxu0 %v1552
  %v1620 = vpop.f32.mrb[0].mxu0
  %v1621 = vadd.f32 0.0, %v1620
  %v1622 = vpop.f32.mrb[0].mxu0
  %1623 = vdwg.mxu0
  %v1625 = vrot.slane %v1621, 4
  %v1627 = vadd.f32 %v1334, %v1625
  %v1628 = vxor.u32 %v1627, 2147483648
  %v1629 = vmul.f32 %v1628, 1.442695
  %v1630 = vpow.pop %v1629
  %v1631 = vadd.f32 %v1630, 1.0
  %v1632 = vrcp.pop %v1631
  %v1633 = vmul.f32 1.0, %v1632
  %v1634 = vtanh.pop %v1627
  %v1636 = vrot.slane %v1541, 6
  %v1638 = vmul.f32 %v1633, %v1636
  %1640 = vrot.lane.b32.xlu0 %v1634, 80
  %v1641 = vpop.permute.xlu0 %1640
  %v1643 = vmul.f32 %v1633, %v1641
  %1645 = vrot.lane.b32.xlu0 %v1643, 16
  %v1646 = vpop.permute.xlu0 %1645
  %v1648 = vadd.f32 %v1638, %v1646
  %v1649 = vtanh.pop %v1648
  %1651 = vrot.lane.b32.xlu0 %v1649, 16
  %v1652 = vpop.permute.xlu0 %1651
  %v1654 = vmul.f32 %v1633, %v1652
  %v1656 = vrot.slane %v1654, 4
  %1657 = vrot.lane.b32.xlu0 %v1656, 96
  %v1658 = vpop.permute.xlu0 %1657
  %v1659 = vsel %vm187, %v1658, 0
  %1661 = vmatprep.subr.mxu0 0.0
  %1662 = vmatpush1.msra.mxu0 %v405
  %1663 = vmatprep.subr.mxu0 0.0
  %1664 = vmatpush1.msra.mxu0 %v406
  %1665 = vmatprep.subr.mxu0 0.0
  %1666 = vmatpush1.msra.mxu0 0.0
  %1667 = vmatprep.subr.mxu0 0.0
  %1668 = vmatpush1.msra.mxu0 0.0
  %1669 = vmatprep.subr.mxu0 0.0
  %1670 = vmatpush1.msra.mxu0 0.0
  %1671 = vmatprep.subr.mxu0 0.0
  %1672 = vmatpush1.msra.mxu0 0.0
  %1673 = vmatprep.subr.mxu0 0.0
  %1674 = vmatpush1.msra.mxu0 0.0
  %1675 = vmatprep.subr.mxu0 0.0
  %1676 = vmatpush1.msra.mxu0 0.0
  %1677 = vmatprep.subr.mxu0 0.0
  %1678 = vmatpush1.msra.mxu0 0.0
  %1679 = vmatprep.subr.mxu0 0.0
  %1680 = vmatpush1.msra.mxu0 0.0
  %1681 = vmatprep.subr.mxu0 0.0
  %1682 = vmatpush1.msra.mxu0 0.0
  %1683 = vmatprep.subr.mxu0 0.0
  %1684 = vmatpush1.msra.mxu0 0.0
  %1685 = vmatprep.subr.mxu0 0.0
  %1686 = vmatpush1.msra.mxu0 0.0
  %1687 = vmatprep.subr.mxu0 0.0
  %1688 = vmatpush1.msra.mxu0 0.0
  %1689 = vmatprep.subr.mxu0 0.0
  %1690 = vmatpush1.msra.mxu0 0.0
  %1691 = vmatprep.subr.mxu0 0.0
  %1692 = vmatpush1.msra.mxu0 0.0
  %1693 = vmatprep.subr.mxu0 0.0
  %1694 = vmatpush1.msra.mxu0 0.0
  %1695 = vmatprep.subr.mxu0 0.0
  %1696 = vmatpush1.msra.mxu0 0.0
  %1697 = vmatprep.subr.mxu0 0.0
  %1698 = vmatpush1.msra.mxu0 0.0
  %1699 = vmatprep.subr.mxu0 0.0
  %1700 = vmatpush1.msra.mxu0 0.0
  %1701 = vmatprep.subr.mxu0 0.0
  %1702 = vmatpush1.msra.mxu0 0.0
  %1703 = vmatprep.subr.mxu0 0.0
  %1704 = vmatpush1.msra.mxu0 0.0
  %1705 = vmatprep.subr.mxu0 0.0
  %1706 = vmatpush1.msra.mxu0 0.0
  %1707 = vmatprep.subr.mxu0 0.0
  %1708 = vmatpush1.msra.mxu0 0.0
  %1709 = vmatprep.subr.mxu0 0.0
  %1710 = vmatpush1.msra.mxu0 0.0
  %1711 = vmatprep.subr.mxu0 0.0
  %1712 = vmatpush1.msra.mxu0 0.0
  %1713 = vmatprep.subr.mxu0 0.0
  %1714 = vmatpush1.msra.mxu0 0.0
  %1715 = vmatprep.subr.mxu0 0.0
  %1716 = vmatpush1.msra.mxu0 0.0
  %1717 = vmatprep.subr.mxu0 0.0
  %1718 = vmatpush1.msra.mxu0 0.0
  %1719 = vmatprep.subr.mxu0 0.0
  %1720 = vmatpush1.msra.mxu0 0.0
  %1721 = vmatprep.subr.mxu0 0.0
  %1722 = vmatpush1.msra.mxu0 0.0
  %1723 = vmatprep.subr.mxu0 0.0
  %1724 = vmatpush1.msra.mxu0 0.0
  %1725 = vmatprep.mubr.f32.mxu0 0.0
  %1726 = vmatmul.mubr.f32.gmra.mrb[0].mxu0 %v1659
  %v1727 = vpop.f32.mrb[0].mxu0
  %v1728 = vadd.f32 0.0, %v1727
  %v1729 = vpop.f32.mrb[0].mxu0
  %1730 = vdwg.mxu0
  %v1732 = vrot.slane %v1728, 2
  %v1734 = vadd.f32 %v1441, %v1732
  %v1735 = vxor.u32 %v1734, 2147483648
  %v1736 = vmul.f32 %v1735, 1.442695
  %v1737 = vpow.pop %v1736
  %v1738 = vadd.f32 %v1737, 1.0
  %v1739 = vrcp.pop %v1738
  %v1740 = vmul.f32 1.0, %v1739
  %v1741 = vtanh.pop %v1734
  %v1743 = vrot.slane %v1648, 6
  %v1745 = vmul.f32 %v1740, %v1743
  %1747 = vrot.lane.b32.xlu0 %v1741, 80
  %v1748 = vpop.permute.xlu0 %1747
  %v1750 = vmul.f32 %v1740, %v1748
  %1752 = vrot.lane.b32.xlu0 %v1750, 16
  %v1753 = vpop.permute.xlu0 %1752
  %v1755 = vadd.f32 %v1745, %v1753
  %v1756 = vtanh.pop %v1755
  %1758 = vrot.lane.b32.xlu0 %v1756, 16
  %v1759 = vpop.permute.xlu0 %1758
  %v1761 = vmul.f32 %v1740, %v1759
  %v1763 = vrot.slane %v461, 6
  %v1765 = vsel %vm400, %v472, %v1763
  %v1767 = vrot.slane %v1761, 6
  %1768 = vrot.lane.b32.xlu0 %v1767, 96
  %v1769 = vpop.permute.xlu0 %1768
  %v1770 = vsel %vm187, %v1769, 0
  %1772 = vmatprep.subr.mxu0 0.0
  %1773 = vmatpush1.msra.mxu0 %v405
  %1774 = vmatprep.subr.mxu0 0.0
  %1775 = vmatpush1.msra.mxu0 %v406
  %1776 = vmatprep.subr.mxu0 0.0
  %1777 = vmatpush1.msra.mxu0 0.0
  %1778 = vmatprep.subr.mxu0 0.0
  %1779 = vmatpush1.msra.mxu0 0.0
  %1780 = vmatprep.subr.mxu0 0.0
  %1781 = vmatpush1.msra.mxu0 0.0
  %1782 = vmatprep.subr.mxu0 0.0
  %1783 = vmatpush1.msra.mxu0 0.0
  %1784 = vmatprep.subr.mxu0 0.0
  %1785 = vmatpush1.msra.mxu0 0.0
  %1786 = vmatprep.subr.mxu0 0.0
  %1787 = vmatpush1.msra.mxu0 0.0
  %1788 = vmatprep.subr.mxu0 0.0
  %1789 = vmatpush1.msra.mxu0 0.0
  %1790 = vmatprep.subr.mxu0 0.0
  %1791 = vmatpush1.msra.mxu0 0.0
  %1792 = vmatprep.subr.mxu0 0.0
  %1793 = vmatpush1.msra.mxu0 0.0
  %1794 = vmatprep.subr.mxu0 0.0
  %1795 = vmatpush1.msra.mxu0 0.0
  %1796 = vmatprep.subr.mxu0 0.0
  %1797 = vmatpush1.msra.mxu0 0.0
  %1798 = vmatprep.subr.mxu0 0.0
  %1799 = vmatpush1.msra.mxu0 0.0
  %1800 = vmatprep.subr.mxu0 0.0
  %1801 = vmatpush1.msra.mxu0 0.0
  %1802 = vmatprep.subr.mxu0 0.0
  %1803 = vmatpush1.msra.mxu0 0.0
  %1804 = vmatprep.subr.mxu0 0.0
  %1805 = vmatpush1.msra.mxu0 0.0
  %1806 = vmatprep.subr.mxu0 0.0
  %1807 = vmatpush1.msra.mxu0 0.0
  %1808 = vmatprep.subr.mxu0 0.0
  %1809 = vmatpush1.msra.mxu0 0.0
  %1810 = vmatprep.subr.mxu0 0.0
  %1811 = vmatpush1.msra.mxu0 0.0
  %1812 = vmatprep.subr.mxu0 0.0
  %1813 = vmatpush1.msra.mxu0 0.0
  %1814 = vmatprep.subr.mxu0 0.0
  %1815 = vmatpush1.msra.mxu0 0.0
  %1816 = vmatprep.subr.mxu0 0.0
  %1817 = vmatpush1.msra.mxu0 0.0
  %1818 = vmatprep.subr.mxu0 0.0
  %1819 = vmatpush1.msra.mxu0 0.0
  %1820 = vmatprep.subr.mxu0 0.0
  %1821 = vmatpush1.msra.mxu0 0.0
  %1822 = vmatprep.subr.mxu0 0.0
  %1823 = vmatpush1.msra.mxu0 0.0
  %1824 = vmatprep.subr.mxu0 0.0
  %1825 = vmatpush1.msra.mxu0 0.0
  %1826 = vmatprep.subr.mxu0 0.0
  %1827 = vmatpush1.msra.mxu0 0.0
  %1828 = vmatprep.subr.mxu0 0.0
  %1829 = vmatpush1.msra.mxu0 0.0
  %1830 = vmatprep.subr.mxu0 0.0
  %1831 = vmatpush1.msra.mxu0 0.0
  %1832 = vmatprep.subr.mxu0 0.0
  %1833 = vmatpush1.msra.mxu0 0.0
  %1834 = vmatprep.subr.mxu0 0.0
  %1835 = vmatpush1.msra.mxu0 0.0
  %1836 = vmatprep.mubr.f32.mxu0 0.0
  %1837 = vmatmul.mubr.f32.gmra.mrb[0].mxu0 %v1770
  %v1838 = vpop.f32.mrb[0].mxu0
  %v1839 = vadd.f32 0.0, %v1838
  %v1840 = vpop.f32.mrb[0].mxu0
  %1841 = vdwg.mxu0
  %v1842 = vadd.f32 %v1765, %v1839
  %v1843 = vxor.u32 %v1842, 2147483648
  %v1844 = vmul.f32 %v1843, 1.442695
  %v1845 = vpow.pop %v1844
  %v1846 = vadd.f32 %v1845, 1.0
  %v1847 = vrcp.pop %v1846
  %v1848 = vmul.f32 1.0, %v1847
  %v1849 = vtanh.pop %v1842
  %v1851 = vrot.slane %v1755, 6
  %v1853 = vmul.f32 %v1848, %v1851
  %1855 = vrot.lane.b32.xlu0 %v1849, 80
  %v1856 = vpop.permute.xlu0 %1855
  %v1858 = vmul.f32 %v1848, %v1856
  %1860 = vrot.lane.b32.xlu0 %v1858, 16
  %v1861 = vpop.permute.xlu0 %1860
  %v1863 = vadd.f32 %v1853, %v1861
  %v1864 = vtanh.pop %v1863
  %1866 = vrot.lane.b32.xlu0 %v1864, 16
  %v1867 = vpop.permute.xlu0 %1866
  %v1869 = vmul.f32 %v1848, %v1867
  %v1870 = vrot.slane %v461, 2
  %v1872 = vsel %vm400, %v472, %v1870
  %1874 = vrot.lane.b32.xlu0 %v1869, 96
  %v1875 = vpop.permute.xlu0 %1874
  %v1876 = vsel %vm187, %v1875, 0
  %1878 = vmatprep.subr.mxu0 0.0
  %1879 = vmatpush1.msra.mxu0 %v405
  %1880 = vmatprep.subr.mxu0 0.0
  %1881 = vmatpush1.msra.mxu0 %v406
  %1882 = vmatprep.subr.mxu0 0.0
  %1883 = vmatpush1.msra.mxu0 0.0
  %1884 = vmatprep.subr.mxu0 0.0
  %1885 = vmatpush1.msra.mxu0 0.0
  %1886 = vmatprep.subr.mxu0 0.0
  %1887 = vmatpush1.msra.mxu0 0.0
  %1888 = vmatprep.subr.mxu0 0.0
  %1889 = vmatpush1.msra.mxu0 0.0
  %1890 = vmatprep.subr.mxu0 0.0
  %1891 = vmatpush1.msra.mxu0 0.0
  %1892 = vmatprep.subr.mxu0 0.0
  %1893 = vmatpush1.msra.mxu0 0.0
  %1894 = vmatprep.subr.mxu0 0.0
  %1895 = vmatpush1.msra.mxu0 0.0
  %1896 = vmatprep.subr.mxu0 0.0
  %1897 = vmatpush1.msra.mxu0 0.0
  %1898 = vmatprep.subr.mxu0 0.0
  %1899 = vmatpush1.msra.mxu0 0.0
  %1900 = vmatprep.subr.mxu0 0.0
  %1901 = vmatpush1.msra.mxu0 0.0
  %1902 = vmatprep.subr.mxu0 0.0
  %1903 = vmatpush1.msra.mxu0 0.0
  %1904 = vmatprep.subr.mxu0 0.0
  %1905 = vmatpush1.msra.mxu0 0.0
  %1906 = vmatprep.subr.mxu0 0.0
  %1907 = vmatpush1.msra.mxu0 0.0
  %1908 = vmatprep.subr.mxu0 0.0
  %1909 = vmatpush1.msra.mxu0 0.0
  %1910 = vmatprep.subr.mxu0 0.0
  %1911 = vmatpush1.msra.mxu0 0.0
  %1912 = vmatprep.subr.mxu0 0.0
  %1913 = vmatpush1.msra.mxu0 0.0
  %1914 = vmatprep.subr.mxu0 0.0
  %1915 = vmatpush1.msra.mxu0 0.0
  %1916 = vmatprep.subr.mxu0 0.0
  %1917 = vmatpush1.msra.mxu0 0.0
  %1918 = vmatprep.subr.mxu0 0.0
  %1919 = vmatpush1.msra.mxu0 0.0
  %1920 = vmatprep.subr.mxu0 0.0
  %1921 = vmatpush1.msra.mxu0 0.0
  %1922 = vmatprep.subr.mxu0 0.0
  %1923 = vmatpush1.msra.mxu0 0.0
  %1924 = vmatprep.subr.mxu0 0.0
  %1925 = vmatpush1.msra.mxu0 0.0
  %1926 = vmatprep.subr.mxu0 0.0
  %1927 = vmatpush1.msra.mxu0 0.0
  %1928 = vmatprep.subr.mxu0 0.0
  %1929 = vmatpush1.msra.mxu0 0.0
  %1930 = vmatprep.subr.mxu0 0.0
  %1931 = vmatpush1.msra.mxu0 0.0
  %1932 = vmatprep.subr.mxu0 0.0
  %1933 = vmatpush1.msra.mxu0 0.0
  %1934 = vmatprep.subr.mxu0 0.0
  %1935 = vmatpush1.msra.mxu0 0.0
  %1936 = vmatprep.subr.mxu0 0.0
  %1937 = vmatpush1.msra.mxu0 0.0
  %1938 = vmatprep.subr.mxu0 0.0
  %1939 = vmatpush1.msra.mxu0 0.0
  %1940 = vmatprep.subr.mxu0 0.0
  %1941 = vmatpush1.msra.mxu0 0.0
  %1942 = vmatprep.mubr.f32.mxu0 0.0
  %1943 = vmatmul.mubr.f32.gmra.mrb[0].mxu0 %v1876
  %v1944 = vpop.f32.mrb[0].mxu0
  %v1945 = vadd.f32 0.0, %v1944
  %v1946 = vpop.f32.mrb[0].mxu0
  %1947 = vdwg.mxu0
  %v1949 = vrot.slane %v1945, 6
  %v1951 = vadd.f32 %v1872, %v1949
  %v1952 = vxor.u32 %v1951, 2147483648
  %v1953 = vmul.f32 %v1952, 1.442695
  %v1954 = vpow.pop %v1953
  %v1955 = vadd.f32 %v1954, 1.0
  %v1956 = vrcp.pop %v1955
  %v1957 = vmul.f32 1.0, %v1956
  %v1958 = vtanh.pop %v1951
  %v1960 = vrot.slane %v1863, 6
  %v1962 = vmul.f32 %v1957, %v1960
  %1964 = vrot.lane.b32.xlu0 %v1958, 80
  %v1965 = vpop.permute.xlu0 %1964
  %v1967 = vmul.f32 %v1957, %v1965
  %1969 = vrot.lane.b32.xlu0 %v1967, 16
  %v1970 = vpop.permute.xlu0 %1969
  %v1972 = vadd.f32 %v1962, %v1970
  %v1973 = vtanh.pop %v1972
  %1975 = vrot.lane.b32.xlu0 %v1973, 16
  %v1976 = vpop.permute.xlu0 %1975
  %v1978 = vmul.f32 %v1957, %v1976
  %v1980 = vrot.slane %v1978, 2
  %1981 = vrot.lane.b32.xlu0 %v1980, 96
  %v1982 = vpop.permute.xlu0 %1981
  %v1983 = vsel %vm187, %v1982, 0
  %1985 = vmatprep.subr.mxu0 0.0
  %1986 = vmatpush1.msra.mxu0 %v405
  %1987 = vmatprep.subr.mxu0 0.0
  %1988 = vmatpush1.msra.mxu0 %v406
  %1989 = vmatprep.subr.mxu0 0.0
  %1990 = vmatpush1.msra.mxu0 0.0
  %1991 = vmatprep.subr.mxu0 0.0
  %1992 = vmatpush1.msra.mxu0 0.0
  %1993 = vmatprep.subr.mxu0 0.0
  %1994 = vmatpush1.msra.mxu0 0.0
  %1995 = vmatprep.subr.mxu0 0.0
  %1996 = vmatpush1.msra.mxu0 0.0
  %1997 = vmatprep.subr.mxu0 0.0
  %1998 = vmatpush1.msra.mxu0 0.0
  %1999 = vmatprep.subr.mxu0 0.0
  %2000 = vmatpush1.msra.mxu0 0.0
  %2001 = vmatprep.subr.mxu0 0.0
  %2002 = vmatpush1.msra.mxu0 0.0
  %2003 = vmatprep.subr.mxu0 0.0
  %2004 = vmatpush1.msra.mxu0 0.0
  %2005 = vmatprep.subr.mxu0 0.0
  %2006 = vmatpush1.msra.mxu0 0.0
  %2007 = vmatprep.subr.mxu0 0.0
  %2008 = vmatpush1.msra.mxu0 0.0
  %2009 = vmatprep.subr.mxu0 0.0
  %2010 = vmatpush1.msra.mxu0 0.0
  %2011 = vmatprep.subr.mxu0 0.0
  %2012 = vmatpush1.msra.mxu0 0.0
  %2013 = vmatprep.subr.mxu0 0.0
  %2014 = vmatpush1.msra.mxu0 0.0
  %2015 = vmatprep.subr.mxu0 0.0
  %2016 = vmatpush1.msra.mxu0 0.0
  %2017 = vmatprep.subr.mxu0 0.0
  %2018 = vmatpush1.msra.mxu0 0.0
  %2019 = vmatprep.subr.mxu0 0.0
  %2020 = vmatpush1.msra.mxu0 0.0
  %2021 = vmatprep.subr.mxu0 0.0
  %2022 = vmatpush1.msra.mxu0 0.0
  %2023 = vmatprep.subr.mxu0 0.0
  %2024 = vmatpush1.msra.mxu0 0.0
  %2025 = vmatprep.subr.mxu0 0.0
  %2026 = vmatpush1.msra.mxu0 0.0
  %2027 = vmatprep.subr.mxu0 0.0
  %2028 = vmatpush1.msra.mxu0 0.0
  %2029 = vmatprep.subr.mxu0 0.0
  %2030 = vmatpush1.msra.mxu0 0.0
  %2031 = vmatprep.subr.mxu0 0.0
  %2032 = vmatpush1.msra.mxu0 0.0
  %2033 = vmatprep.subr.mxu0 0.0
  %2034 = vmatpush1.msra.mxu0 0.0
  %2035 = vmatprep.subr.mxu0 0.0
  %2036 = vmatpush1.msra.mxu0 0.0
  %2037 = vmatprep.subr.mxu0 0.0
  %2038 = vmatpush1.msra.mxu0 0.0
  %2039 = vmatprep.subr.mxu0 0.0
  %2040 = vmatpush1.msra.mxu0 0.0
  %2041 = vmatprep.subr.mxu0 0.0
  %2042 = vmatpush1.msra.mxu0 0.0
  %2043 = vmatprep.subr.mxu0 0.0
  %2044 = vmatpush1.msra.mxu0 0.0
  %2045 = vmatprep.subr.mxu0 0.0
  %2046 = vmatpush1.msra.mxu0 0.0
  %2047 = vmatprep.subr.mxu0 0.0
  %2048 = vmatpush1.msra.mxu0 0.0
  %2049 = vmatprep.mubr.f32.mxu0 0.0
  %2050 = vmatmul.mubr.f32.gmra.mrb[0].mxu0 %v1983
  %v2051 = vpop.f32.mrb[0].mxu0
  %v2052 = vadd.f32 0.0, %v2051
  %v2053 = vpop.f32.mrb[0].mxu0
  %2054 = vdwg.mxu0
  %v2056 = vrot.slane %v2052, 4
  %v2058 = vadd.f32 %v1765, %v2056
  %v2059 = vxor.u32 %v2058, 2147483648
  %v2060 = vmul.f32 %v2059, 1.442695
  %v2061 = vpow.pop %v2060
  %v2062 = vadd.f32 %v2061, 1.0
  %v2063 = vrcp.pop %v2062
  %v2064 = vmul.f32 1.0, %v2063
  %v2065 = vtanh.pop %v2058
  %v2067 = vrot.slane %v1972, 6
  %v2069 = vmul.f32 %v2064, %v2067
  %2071 = vrot.lane.b32.xlu0 %v2065, 80
  %v2072 = vpop.permute.xlu0 %2071
  %v2074 = vmul.f32 %v2064, %v2072
  %2076 = vrot.lane.b32.xlu0 %v2074, 16
  %v2077 = vpop.permute.xlu0 %2076
  %v2079 = vadd.f32 %v2069, %v2077
  %v2080 = vtanh.pop %v2079
  %2082 = vrot.lane.b32.xlu0 %v2080, 16
  %v2083 = vpop.permute.xlu0 %2082
  %v2085 = vmul.f32 %v2064, %v2083
  %v2087 = vrot.slane %v2085, 4
  %2088 = vrot.lane.b32.xlu0 %v2087, 96
  %v2089 = vpop.permute.xlu0 %2088
  %v2090 = vsel %vm187, %v2089, 0
  %2092 = vmatprep.subr.mxu0 0.0
  %2093 = vmatpush1.msra.mxu0 %v405
  %2094 = vmatprep.subr.mxu0 0.0
  %2095 = vmatpush1.msra.mxu0 %v406
  %2096 = vmatprep.subr.mxu0 0.0
  %2097 = vmatpush1.msra.mxu0 0.0
  %2098 = vmatprep.subr.mxu0 0.0
  %2099 = vmatpush1.msra.mxu0 0.0
  %2100 = vmatprep.subr.mxu0 0.0
  %2101 = vmatpush1.msra.mxu0 0.0
  %2102 = vmatprep.subr.mxu0 0.0
  %2103 = vmatpush1.msra.mxu0 0.0
  %2104 = vmatprep.subr.mxu0 0.0
  %2105 = vmatpush1.msra.mxu0 0.0
  %2106 = vmatprep.subr.mxu0 0.0
  %2107 = vmatpush1.msra.mxu0 0.0
  %2108 = vmatprep.subr.mxu0 0.0
  %2109 = vmatpush1.msra.mxu0 0.0
  %2110 = vmatprep.subr.mxu0 0.0
  %2111 = vmatpush1.msra.mxu0 0.0
  %2112 = vmatprep.subr.mxu0 0.0
  %2113 = vmatpush1.msra.mxu0 0.0
  %2114 = vmatprep.subr.mxu0 0.0
  %2115 = vmatpush1.msra.mxu0 0.0
  %2116 = vmatprep.subr.mxu0 0.0
  %2117 = vmatpush1.msra.mxu0 0.0
  %2118 = vmatprep.subr.mxu0 0.0
  %2119 = vmatpush1.msra.mxu0 0.0
  %2120 = vmatprep.subr.mxu0 0.0
  %2121 = vmatpush1.msra.mxu0 0.0
  %2122 = vmatprep.subr.mxu0 0.0
  %2123 = vmatpush1.msra.mxu0 0.0
  %2124 = vmatprep.subr.mxu0 0.0
  %2125 = vmatpush1.msra.mxu0 0.0
  %2126 = vmatprep.subr.mxu0 0.0
  %2127 = vmatpush1.msra.mxu0 0.0
  %2128 = vmatprep.subr.mxu0 0.0
  %2129 = vmatpush1.msra.mxu0 0.0
  %2130 = vmatprep.subr.mxu0 0.0
  %2131 = vmatpush1.msra.mxu0 0.0
  %2132 = vmatprep.subr.mxu0 0.0
  %2133 = vmatpush1.msra.mxu0 0.0
  %2134 = vmatprep.subr.mxu0 0.0
  %2135 = vmatpush1.msra.mxu0 0.0
  %2136 = vmatprep.subr.mxu0 0.0
  %2137 = vmatpush1.msra.mxu0 0.0
  %2138 = vmatprep.subr.mxu0 0.0
  %2139 = vmatpush1.msra.mxu0 0.0
  %2140 = vmatprep.subr.mxu0 0.0
  %2141 = vmatpush1.msra.mxu0 0.0
  %2142 = vmatprep.subr.mxu0 0.0
  %2143 = vmatpush1.msra.mxu0 0.0
  %2144 = vmatprep.subr.mxu0 0.0
  %2145 = vmatpush1.msra.mxu0 0.0
  %2146 = vmatprep.subr.mxu0 0.0
  %2147 = vmatpush1.msra.mxu0 0.0
  %2148 = vmatprep.subr.mxu0 0.0
  %2149 = vmatpush1.msra.mxu0 0.0
  %2150 = vmatprep.subr.mxu0 0.0
  %2151 = vmatpush1.msra.mxu0 0.0
  %2152 = vmatprep.subr.mxu0 0.0
  %2153 = vmatpush1.msra.mxu0 0.0
  %2154 = vmatprep.subr.mxu0 0.0
  %2155 = vmatpush1.msra.mxu0 0.0
  %2156 = vmatprep.mubr.f32.mxu0 0.0
  %2157 = vmatmul.mubr.f32.gmra.mrb[0].mxu0 %v2090
  %v2158 = vpop.f32.mrb[0].mxu0
  %v2159 = vadd.f32 0.0, %v2158
  %v2160 = vpop.f32.mrb[0].mxu0
  %2161 = vdwg.mxu0
  %v2163 = vrot.slane %v2159, 2
  %v2165 = vadd.f32 %v1872, %v2163
  %v2166 = vxor.u32 %v2165, 2147483648
  %v2167 = vmul.f32 %v2166, 1.442695
  %v2168 = vpow.pop %v2167
  %v2169 = vadd.f32 %v2168, 1.0
  %v2170 = vrcp.pop %v2169
  %v2171 = vmul.f32 1.0, %v2170
  %v2172 = vtanh.pop %v2165
  %v2174 = vrot.slane %v2079, 6
  %v2176 = vmul.f32 %v2171, %v2174
  %2178 = vrot.lane.b32.xlu0 %v2172, 80
  %v2179 = vpop.permute.xlu0 %2178
  %v2181 = vmul.f32 %v2171, %v2179
  %2183 = vrot.lane.b32.xlu0 %v2181, 16
  %v2184 = vpop.permute.xlu0 %2183
  %v2186 = vadd.f32 %v2176, %v2184
  %v2187 = vtanh.pop %v2186
  %2189 = vrot.lane.b32.xlu0 %v2187, 16
  %v2190 = vpop.permute.xlu0 %2189
  %v2192 = vmul.f32 %v2171, %v2190
  %v2194 = vrot.slane %v2192, 6
  %2195 = vrot.lane.b32.xlu0 %v2194, 96
  %v2196 = vpop.permute.xlu0 %2195
  %v2199 = vsel %vm387, %v2196, %v582
  %v2200 = vmax.f32 %v2199, 0.0
  %vm2203 = vcmask 1041409
  %v2204 = vsel %vm2203, %v206, %v197
  %v2208 = vsel %vm2203, %v260, %v251
  %2209 = vrot.lane.b32.xlu0 %v2208, 96
  %v2210 = vpop.permute.xlu0 %2209
  %v2214 = vsel %vm2203, %v384, %v375
  %2215 = vrot.lane.b32.xlu0 %v2214, 48
  %v2216 = vpop.permute.xlu0 %2215
  %2219 = vrot.lane.b32.xlu0 %v2200, 48
  %v2220 = vpop.permute.xlu0 %2219
  %v2222 = vsel %vm187, %v2204, %v2210
  %v2223 = vsel %vm62, %v2222, %v2216
  %vm2224 = vcmask 392192
  %v2225 = vsel %vm2224, %v2223, %v2220
  %vm2226 = vcmask 523264
  %v2227 = vsel %vm2226, %v2225, 0.0
  %2228 = vst [vmem:[%s6] sm:$0x3] %v2227
  // Predicated region
  $region26: #{sub_cnn_bilstm_forward.1} parent=0 // pred_check
    _
  $region27: #{sub_cnn_bilstm_forward.1} parent=0 // pred_check_branch
    %2230 = sbr.rel (0) target = $region29
  $region28: #{sub_cnn_bilstm_forward.1} parent=0 // pred_region
    _
  $region29: #{sub_cnn_bilstm_forward.1} parent=0 // pred_fallthru
    _
  // Predicated region
  $region30: #{sub_cnn_bilstm_forward.1} parent=0 // pred_check
    _
  $region31: #{sub_cnn_bilstm_forward.1} parent=0 // pred_check_branch
    %2232 = sbr.rel (0) target = $region33
  $region32: #{sub_cnn_bilstm_forward.1} parent=0 // pred_region
    _
  $region33: #{sub_cnn_bilstm_forward.1} parent=0 // pred_fallthru
    _

</llo_original>
